<compile_context>
chip_gen: v7x
topology: tpu7x:2x2x1
jax: 0.10.0
libtpu: 0.0.40
codegen_flags: <defaults>
</compile_context>

<pallas_src>
import functools

import numpy as np
import jax
import jax.numpy as jnp
from jax.experimental import pallas as pl
from jax.experimental.pallas import tpu as pltpu

_LANE_CANDIDATES = (2048, 1024, 512, 256, 128)  # lane-dense trailing dims
_TARGET_BLOCK_BYTES = 2 * 1024 * 1024           # ~2 MiB/block -> 4 buffers ~ 8 MiB VMEM (safe on v7x)
_MIN_KERNEL_BYTES = 128 * 1024                  # below this, launch/DMA overhead dominates -> reshape only


def _copy_kernel(x_ref, o_ref):
    # Identity copy of the current VMEM tile.
    o_ref[...] = x_ref[...]


def _resolve_shape(shape, numel):
    """Resolve a single -1 entry like torch.Tensor.view does."""
    shape = list(shape)
    if shape.count(-1) > 1:
        raise ValueError("only one dimension can be inferred")
    if -1 in shape:
        known = 1
        for s in shape:
            if s != -1:
                known *= s
        if known == 0 or numel % known != 0:
            raise ValueError(f"cannot view {numel} elements as {tuple(shape)}")
        shape[shape.index(-1)] = numel // known
    if int(np.prod(shape)) != numel:
        raise ValueError(f"shape {tuple(shape)} invalid for {numel} elements")
    return tuple(int(s) for s in shape)


@functools.partial(jax.jit, static_argnames=("rows", "cols", "block_rows", "out_shape"))
def _view_copy(x, *, rows, cols, block_rows, out_shape):
    """Tiled, lane-dense identity copy followed by a metadata-only reshape."""
    x2d = x.reshape(rows, cols)
    grid = (pl.cdiv(rows, block_rows),)
    y2d = pl.pallas_call(
        _copy_kernel,
        out_shape=jax.ShapeDtypeStruct((rows, cols), x.dtype),
        grid_spec=pltpu.PrefetchScalarGridSpec(
            num_scalar_prefetch=0,
            grid=grid,
            in_specs=[pl.BlockSpec((block_rows, cols), lambda i: (i, 0))],
            out_specs=pl.BlockSpec((block_rows, cols), lambda i: (i, 0)),
        ),
        compiler_params=pltpu.CompilerParams(
            dimension_semantics=("parallel",),          # let both v7x TCs share blocks
            vmem_limit_bytes=32 * 1024 * 1024,          # explicit budget (v7x-safe)
        ),
        # Pure copy: alias input 0 with output 0 so XLA can skip the round trip
        # whenever the operand buffer is donateable.
        input_output_aliases={0: 0},
    )(x2d)
    return y2d.reshape(out_shape)


class View:
    """JAX/Pallas equivalent of the PyTorch View module (no parameters)."""

    def __init__(self, *shape):
        self.shape = shape

    def __call__(self, x):
        numel = int(np.prod(x.shape)) if x.ndim > 0 else 1
        out_shape = _resolve_shape(self.shape, numel)
        itemsize = jnp.dtype(x.dtype).itemsize

        # A view of a contiguous tensor is metadata-only; only route through
        # the Pallas copy when the tensor is large enough for the copy to be a
        # meaningful HBM-bound op AND it factors into a lane-dense slab.
        if numel == 0 or numel * itemsize < _MIN_KERNEL_BYTES:
            return x.reshape(out_shape)

        cols = next((c for c in _LANE_CANDIDATES if numel % c == 0), None)
        if cols is None:
            # TODO(synk): element counts not divisible by 128 fall back to the
            # metadata-only reshape instead of a padded/masked Pallas copy.
            return x.reshape(out_shape)

        rows = numel // cols
        # Sublane packing for the dtype: f32 -> 8 rows, bf16 -> 16, int8 -> 32.
        sub = max(8, 32 // itemsize)
        rows_target = max(sub, (_TARGET_BLOCK_BYTES // (cols * itemsize)) // sub * sub)
        # Either the full leading dim (always a legal block) or an aligned tile.
        block_rows = rows if rows <= rows_target else rows_target

        return _view_copy(
            x, rows=rows, cols=cols, block_rows=block_rows, out_shape=out_shape
        )


if __name__ == "__main__":
    key = jax.random.PRNGKey(0)
    k_small, k_big = jax.random.split(key)

    # Canonical usage in the source repo: flatten NCHW features for a linear
    # classifier.  Tiny tensor -> metadata-only reshape path.
    x_small = jax.random.normal(k_small, (2, 4, 16, 16), dtype=jnp.float32)
    y_small = jax.block_until_ready(View(2, -1)(x_small))
    assert y_small.shape == (2, 4 * 16 * 16), y_small.shape
    assert y_small.dtype == x_small.dtype
    np.testing.assert_array_equal(
        np.asarray(y_small), np.asarray(x_small).reshape(2, -1)
    )

    # Larger batch (8 MiB) to exercise the tiled Pallas copy path:
    # slab (1024, 2048) f32, block (256, 2048) ~ 2 MiB, grid=(4,).
    x_big = jax.random.normal(k_big, (2048, 4, 16, 16), dtype=jnp.float32)
    y_big = jax.block_until_ready(View(2048, -1)(x_big))
    assert y_big.shape == (2048, 4 * 16 * 16), y_big.shape
    assert y_big.dtype == x_big.dtype
    np.testing.assert_array_equal(
        np.asarray(y_big), np.asarray(x_big).reshape(2048, -1)
    )

    print("KERNEL_OK")
</pallas_src>

<mosaic_0001>
module attributes {stable_mosaic.version = 11 : i64} {
  func.func @_copy_kernel(%arg0: i32, %arg1: memref<256x2048xf32, #tpu.memory_space<vmem>>, %arg2: memref<256x2048xf32, #tpu.memory_space<vmem>>) attributes {dimension_semantics = [#tpu.dimension_semantics<parallel>], iteration_bounds = array<i64: 4>, scalar_prefetch = 0 : i64, scratch_operands = 0 : i64, tpu.core_type = #tpu.core_type<tc>, window_params = [{transform_indices = @transform_0, window_bounds = array<i64: 256, 2048>}, {transform_indices = @transform_1, window_bounds = array<i64: 256, 2048>}]} {
    %c0 = arith.constant 0 : index
    %c0_0 = arith.constant 0 : index
    %0 = vector.load %arg1[%c0, %c0_0] : memref<256x2048xf32, #tpu.memory_space<vmem>>, vector<256x2048xf32>
    %c0_1 = arith.constant 0 : index
    %c0_2 = arith.constant 0 : index
    %1 = vector.load %arg2[%c0_1, %c0_2] : memref<256x2048xf32, #tpu.memory_space<vmem>>, vector<256x2048xf32>
    tpu.vector_store %arg2[%c0_1, %c0_2], %0 {strides = array<i32>} : memref<256x2048xf32, #tpu.memory_space<vmem>>, vector<256x2048xf32>,
    return
  }
  func.func @transform_0(%arg0: i32) -> (i32, i32) {
    %c0_i32 = arith.constant 0 : i32
    %c0_i32_0 = arith.constant 0 : i32
    return %arg0, %c0_i32 : i32, i32
  }
  func.func @transform_1(%arg0: i32) -> (i32, i32) {
    %c0_i32 = arith.constant 0 : i32
    %c0_i32_0 = arith.constant 0 : i32
    return %arg0, %c0_i32 : i32, i32
  }
}

</mosaic_0001>

<llo_original>
// kernel: _view_copy.1
$region0: #{_view_copy.1}
  #allocation0 [shape = 'u32[]', space=smem, size = 0x4, offset = 0x4, fixed_abs, tag = 'smem constant byte address 0x4 - core index']
  #allocation1 [shape = 'u32[144,128]{1,0:T(1,128)}', space=vmem, size = 0x12000, scoped, tag = 'internal scratch']
  %s0 = inlined_call_operand.vmem [shape: f32[1024,2048], index: 0, kind: input, shape index: {}, may-alias: {0,1}]
  %s1 = inlined_call_operand.vmem [shape: f32[1024,2048], index: 1, kind: output, shape index: {}, may-alias: {0,1}]
  %s2 = sld [smem:[#allocation0]]
  $region37: #{_view_copy.1} parent=0
    _
  %s4 = ssub.s32 1, %s2
  %s5 = scalar_select 0, %s4, %s2
  loop: start=0, step=1, limit=6
  $region2: #{_view_copy.1} parent=0 // loop_pre_header
    _
  $region3: #{_view_copy.1} parent=0 // loop_header
    %s7 = sphi 0, %s11
    %p8 = scmp.ge.s32.totalorder %s7, 6
    %s17 = sphi 0, %s19
    %s20 = sphi 0, %s17
    %s21 = sphi 0, %s20
    %s37 = sphi 0, %s21
    %s43 = sphi 0, %s45
    %s46 = sphi 0, %s43
    %s47 = sphi 0, %s46
    %s63 = sphi 0, %s47
  $region4: #{_view_copy.1} parent=0 // loop_header_branch
    %10 = sbr.rel (%p8) target = $region8
  $region5: #{_view_copy.1} parent=0 // loop_body
    %s12 = ssub.s32 %s7, 1
    %s13 = ssub.s32 %s7, 2
    %s14 = sadd.s32 %s7, 1
    %s15 = ssub.s32 %s7, %s14
    %p16 = scmp.eq.s32.totalorder %s15, 0
    %s18 = sadd.s32 %s17, 1
    %s19 = scalar_select %p16, %s17, %s18
    %p22 = pneg %p16
    %p23 = scmp.eq.s32.totalorder %s7, 3
    %p24 = por %p22, %p23
    %p25 = scmp.ne.s32.totalorder %s17, %s20
    %p26 = scmp.eq.s32.totalorder %s7, 0
    %p27 = por %p25, %p26
    %p28 = scmp.ne.s32.totalorder %s17, %s20
    %p29 = scmp.eq.s32.totalorder %s12, 3
    %p30 = por %p28, %p29
    %p31 = scmp.ne.s32.totalorder %s20, %s21
    %p32 = scmp.eq.s32.totalorder %s12, 0
    %p33 = por %p31, %p32
    %p34 = scmp.ne.s32.totalorder %s20, %s21
    %p35 = scmp.eq.s32.totalorder %s13, 3
    %p36 = por %p34, %p35
    %p38 = scmp.ne.s32.totalorder %s21, %s37
    %p39 = scmp.eq.s32.totalorder %s13, 0
    %p40 = por %p38, %p39
    %s41 = ssub.s32 %s7, %s14
    %p42 = scmp.eq.s32.totalorder %s41, 0
    %s44 = sadd.s32 %s43, 1
    %s45 = scalar_select %p42, %s43, %s44
    %p48 = pneg %p42
    %p49 = scmp.eq.s32.totalorder %s7, 3
    %p50 = por %p48, %p49
    %p51 = scmp.ne.s32.totalorder %s43, %s46
    %p52 = scmp.eq.s32.totalorder %s7, 0
    %p53 = por %p51, %p52
    %p54 = scmp.ne.s32.totalorder %s43, %s46
    %p55 = scmp.eq.s32.totalorder %s12, 3
    %p56 = por %p54, %p55
    %p57 = scmp.ne.s32.totalorder %s46, %s47
    %p58 = scmp.eq.s32.totalorder %s12, 0
    %p59 = por %p57, %p58
    %p60 = scmp.ne.s32.totalorder %s46, %s47
    %p61 = scmp.eq.s32.totalorder %s13, 3
    %p62 = por %p60, %p61
    %p64 = scmp.ne.s32.totalorder %s47, %s63
    %p65 = scmp.eq.s32.totalorder %s13, 0
    %p66 = por %p64, %p65
    %p67 = scmp.le.s32.totalorder 1, %s7
    %p68 = scmp.lt.s32.totalorder %s7, 5
    %p69 = pnand %p67, %p68
    %p70 = pneg %p69
    // Predicated region
    $region9: #{_view_copy.1} parent=5 // pred_check
      _
    $region10: #{_view_copy.1} parent=5 // pred_check_branch
      %72 = sbr.rel (%p69) target = $region12
    $region11: #{_view_copy.1} parent=5 // pred_region
      %s73 = ssub.s32 %s7, 1
    $region12: #{_view_copy.1} parent=5 // pred_fallthru
      _
    %p74 = scmp.lt.s32.totalorder %s7, 4
    // Predicated region
    $region13: #{_view_copy.1} parent=5 // pred_check
      %p75 = pneg %p74
    $region14: #{_view_copy.1} parent=5 // pred_check_branch
      %77 = sbr.rel (%p75) target = $region16
    $region15: #{_view_copy.1} parent=5 // pred_region
      // Predicated region
      $region17: #{_view_copy.1} parent=15 // pred_check
        %p78 = pneg %p27
      $region18: #{_view_copy.1} parent=15 // pred_check_branch
        %80 = sbr.rel (%p78) target = $region20
      $region19: #{_view_copy.1} parent=15 // pred_region
        %s81 = smul.u32 32, %s7
        %p82 = scmp.lt.s32.totalorder %s81, 127
        %s83 = scalar_select %p82, %s81, 127
        %s84 = smul.addr %s83, 16
        %s85 = smul.addr %s84, 8
        %s86 = scalar_lea.vmem %s0, %s85
        %s87 = smul.u32 32, %s7
      $region20: #{_view_copy.1} parent=15 // pred_fallthru
        _
    $region16: #{_view_copy.1} parent=5 // pred_fallthru
      _
    %p88 = scmp.le.s32.totalorder 1, %s7
    %p89 = scmp.lt.s32.totalorder %s7, 5
    %p90 = pnand %p88, %p89
    %p91 = pneg %p90
    // Predicated region
    $region21: #{_view_copy.1} parent=5 // pred_check
      _
    $region22: #{_view_copy.1} parent=5 // pred_check_branch
      %93 = sbr.rel (%p90) target = $region24
    $region23: #{_view_copy.1} parent=5 // pred_region
      %s94 = ssub.s32 %s7, 1
      %s95 = smul.u32 32, %s12
      %p96 = scmp.lt.s32.totalorder %s95, 127
      %s97 = scalar_select %p96, %s95, 127
      %s98 = smul.addr %s97, 16
      %s99 = smul.addr %s98, 8
      %s100 = scalar_lea.vmem %s0, %s99
      %p101 = pneg %p33
      %p102 = pneg %p30
      %p103 = pneg %p59
      %p104 = pneg %p56
      %s105 = smul.u32 32, %s12
      %p106 = scmp.lt.s32.totalorder %s105, 127
      %s107 = scalar_select %p106, %s105, 127
      %s108 = smul.addr %s107, 16
      %s109 = smul.addr %s108, 8
      %s110 = scalar_lea.vmem %s1, %s109
      %s111 = smul.u32 32, %s12
      %p112 = scmp.lt.s32.totalorder %s111, 127
      %s113 = scalar_select %p112, %s111, 127
      %s114 = smul.addr %s113, 16
      %s115 = smul.addr %s114, 8
      %s116 = scalar_lea.vmem %s0, %s115
      %s117 = smul.u32 32, %s12
      %s118 = smul.u32 32, %s12
      %p119 = scmp.lt.s32.totalorder %s118, 127
      %s120 = scalar_select %p119, %s118, 127
      %s121 = smul.addr %s120, 16
      %s122 = smul.addr %s121, 8
      %s123 = scalar_lea.vmem %s1, %s122
      %s124 = smul.u32 32, %s12
      %v125 = vld [vmem:[%s116] sm:$0xff]
      %v126 = vld [vmem:[%s116 + $0x8] sm:$0xff]
      %v127 = vld [vmem:[%s116 + $0x10] sm:$0xff]
      %v128 = vld [vmem:[%s116 + $0x18] sm:$0xff]
      %v129 = vld [vmem:[%s116 + $0x20] sm:$0xff]
      %v130 = vld [vmem:[%s116 + $0x28] sm:$0xff]
      %v131 = vld [vmem:[%s116 + $0x30] sm:$0xff]
      %v132 = vld [vmem:[%s116 + $0x38] sm:$0xff]
      %v133 = vld [vmem:[%s116 + $0x40] sm:$0xff]
      %v134 = vld [vmem:[%s116 + $0x48] sm:$0xff]
      %v135 = vld [vmem:[%s116 + $0x50] sm:$0xff]
      %v136 = vld [vmem:[%s116 + $0x58] sm:$0xff]
      %v137 = vld [vmem:[%s116 + $0x60] sm:$0xff]
      %v138 = vld [vmem:[%s116 + $0x68] sm:$0xff]
      %v139 = vld [vmem:[%s116 + $0x70] sm:$0xff]
      %v140 = vld [vmem:[%s116 + $0x78] sm:$0xff]
      %v141 = vld [vmem:[%s116 + $0x80] sm:$0xff]
      %v142 = vld [vmem:[%s116 + $0x88] sm:$0xff]
      %v143 = vld [vmem:[%s116 + $0x90] sm:$0xff]
      %v144 = vld [vmem:[%s116 + $0x98] sm:$0xff]
      %v145 = vld [vmem:[%s116 + $0xa0] sm:$0xff]
      %v146 = vld [vmem:[%s116 + $0xa8] sm:$0xff]
      %v147 = vld [vmem:[%s116 + $0xb0] sm:$0xff]
      %v148 = vld [vmem:[%s116 + $0xb8] sm:$0xff]
      %v149 = vld [vmem:[%s116 + $0xc0] sm:$0xff]
      %v150 = vld [vmem:[%s116 + $0xc8] sm:$0xff]
      %v151 = vld [vmem:[%s116 + $0xd0] sm:$0xff]
      %v152 = vld [vmem:[%s116 + $0xd8] sm:$0xff]
      %v153 = vld [vmem:[%s116 + $0xe0] sm:$0xff]
      %v154 = vld [vmem:[%s116 + $0xe8] sm:$0xff]
      %v155 = vld [vmem:[%s116 + $0xf0] sm:$0xff]
      %v156 = vld [vmem:[%s116 + $0xf8] sm:$0xff]
      %v157 = vld [vmem:[%s116 + $0x100] sm:$0xff]
      %v158 = vld [vmem:[%s116 + $0x108] sm:$0xff]
      %v159 = vld [vmem:[%s116 + $0x110] sm:$0xff]
      %v160 = vld [vmem:[%s116 + $0x118] sm:$0xff]
      %v161 = vld [vmem:[%s116 + $0x120] sm:$0xff]
      %v162 = vld [vmem:[%s116 + $0x128] sm:$0xff]
      %v163 = vld [vmem:[%s116 + $0x130] sm:$0xff]
      %v164 = vld [vmem:[%s116 + $0x138] sm:$0xff]
      %v165 = vld [vmem:[%s116 + $0x140] sm:$0xff]
      %v166 = vld [vmem:[%s116 + $0x148] sm:$0xff]
      %v167 = vld [vmem:[%s116 + $0x150] sm:$0xff]
      %v168 = vld [vmem:[%s116 + $0x158] sm:$0xff]
      %v169 = vld [vmem:[%s116 + $0x160] sm:$0xff]
      %v170 = vld [vmem:[%s116 + $0x168] sm:$0xff]
      %v171 = vld [vmem:[%s116 + $0x170] sm:$0xff]
      %v172 = vld [vmem:[%s116 + $0x178] sm:$0xff]
      %v173 = vld [vmem:[%s116 + $0x180] sm:$0xff]
      %v174 = vld [vmem:[%s116 + $0x188] sm:$0xff]
      %v175 = vld [vmem:[%s116 + $0x190] sm:$0xff]
      %v176 = vld [vmem:[%s116 + $0x198] sm:$0xff]
      %v177 = vld [vmem:[%s116 + $0x1a0] sm:$0xff]
      %v178 = vld [vmem:[%s116 + $0x1a8] sm:$0xff]
      %v179 = vld [vmem:[%s116 + $0x1b0] sm:$0xff]
      %v180 = vld [vmem:[%s116 + $0x1b8] sm:$0xff]
      %v181 = vld [vmem:[%s116 + $0x1c0] sm:$0xff]
      %v182 = vld [vmem:[%s116 + $0x1c8] sm:$0xff]
      %v183 = vld [vmem:[%s116 + $0x1d0] sm:$0xff]
      %v184 = vld [vmem:[%s116 + $0x1d8] sm:$0xff]
      %v185 = vld [vmem:[%s116 + $0x1e0] sm:$0xff]
      %v186 = vld [vmem:[%s116 + $0x1e8] sm:$0xff]
      %v187 = vld [vmem:[%s116 + $0x1f0] sm:$0xff]
      %v188 = vld [vmem:[%s116 + $0x1f8] sm:$0xff]
      %v189 = vld [vmem:[%s116 + $0x200] sm:$0xff]
      %v190 = vld [vmem:[%s116 + $0x208] sm:$0xff]
      %v191 = vld [vmem:[%s116 + $0x210] sm:$0xff]
      %v192 = vld [vmem:[%s116 + $0x218] sm:$0xff]
      %v193 = vld [vmem:[%s116 + $0x220] sm:$0xff]
      %v194 = vld [vmem:[%s116 + $0x228] sm:$0xff]
      %v195 = vld [vmem:[%s116 + $0x230] sm:$0xff]
      %v196 = vld [vmem:[%s116 + $0x238] sm:$0xff]
      %v197 = vld [vmem:[%s116 + $0x240] sm:$0xff]
      %v198 = vld [vmem:[%s116 + $0x248] sm:$0xff]
      %v199 = vld [vmem:[%s116 + $0x250] sm:$0xff]
      %v200 = vld [vmem:[%s116 + $0x258] sm:$0xff]
      %v201 = vld [vmem:[%s116 + $0x260] sm:$0xff]
      %v202 = vld [vmem:[%s116 + $0x268] sm:$0xff]
      %v203 = vld [vmem:[%s116 + $0x270] sm:$0xff]
      %v204 = vld [vmem:[%s116 + $0x278] sm:$0xff]
      %v205 = vld [vmem:[%s116 + $0x280] sm:$0xff]
      %v206 = vld [vmem:[%s116 + $0x288] sm:$0xff]
      %v207 = vld [vmem:[%s116 + $0x290] sm:$0xff]
      %v208 = vld [vmem:[%s116 + $0x298] sm:$0xff]
      %v209 = vld [vmem:[%s116 + $0x2a0] sm:$0xff]
      %v210 = vld [vmem:[%s116 + $0x2a8] sm:$0xff]
      %v211 = vld [vmem:[%s116 + $0x2b0] sm:$0xff]
      %v212 = vld [vmem:[%s116 + $0x2b8] sm:$0xff]
      %v213 = vld [vmem:[%s116 + $0x2c0] sm:$0xff]
      %v214 = vld [vmem:[%s116 + $0x2c8] sm:$0xff]
      %v215 = vld [vmem:[%s116 + $0x2d0] sm:$0xff]
      %v216 = vld [vmem:[%s116 + $0x2d8] sm:$0xff]
      %v217 = vld [vmem:[%s116 + $0x2e0] sm:$0xff]
      %v218 = vld [vmem:[%s116 + $0x2e8] sm:$0xff]
      %v219 = vld [vmem:[%s116 + $0x2f0] sm:$0xff]
      %v220 = vld [vmem:[%s116 + $0x2f8] sm:$0xff]
      %v221 = vld [vmem:[%s116 + $0x300] sm:$0xff]
      %v222 = vld [vmem:[%s116 + $0x308] sm:$0xff]
      %v223 = vld [vmem:[%s116 + $0x310] sm:$0xff]
      %v224 = vld [vmem:[%s116 + $0x318] sm:$0xff]
      %v225 = vld [vmem:[%s116 + $0x320] sm:$0xff]
      %v226 = vld [vmem:[%s116 + $0x328] sm:$0xff]
      %v227 = vld [vmem:[%s116 + $0x330] sm:$0xff]
      %v228 = vld [vmem:[%s116 + $0x338] sm:$0xff]
      %v229 = vld [vmem:[%s116 + $0x340] sm:$0xff]
      %v230 = vld [vmem:[%s116 + $0x348] sm:$0xff]
      %v231 = vld [vmem:[%s116 + $0x350] sm:$0xff]
      %v232 = vld [vmem:[%s116 + $0x358] sm:$0xff]
      %v233 = vld [vmem:[%s116 + $0x360] sm:$0xff]
      %v234 = vld [vmem:[%s116 + $0x368] sm:$0xff]
      %v235 = vld [vmem:[%s116 + $0x370] sm:$0xff]
      %v236 = vld [vmem:[%s116 + $0x378] sm:$0xff]
      %v237 = vld [vmem:[%s116 + $0x380] sm:$0xff]
      %v238 = vld [vmem:[%s116 + $0x388] sm:$0xff]
      %v239 = vld [vmem:[%s116 + $0x390] sm:$0xff]
      %v240 = vld [vmem:[%s116 + $0x398] sm:$0xff]
      %v241 = vld [vmem:[%s116 + $0x3a0] sm:$0xff]
      %v242 = vld [vmem:[%s116 + $0x3a8] sm:$0xff]
      %v243 = vld [vmem:[%s116 + $0x3b0] sm:$0xff]
      %v244 = vld [vmem:[%s116 + $0x3b8] sm:$0xff]
      %v245 = vld [vmem:[%s116 + $0x3c0] sm:$0xff]
      %v246 = vld [vmem:[%s116 + $0x3c8] sm:$0xff]
      %v247 = vld [vmem:[%s116 + $0x3d0] sm:$0xff]
      %v248 = vld [vmem:[%s116 + $0x3d8] sm:$0xff]
      %v249 = vld [vmem:[%s116 + $0x3e0] sm:$0xff]
      %v250 = vld [vmem:[%s116 + $0x3e8] sm:$0xff]
      %v251 = vld [vmem:[%s116 + $0x3f0] sm:$0xff]
      %v252 = vld [vmem:[%s116 + $0x3f8] sm:$0xff]
      %v253 = vld [vmem:[%s116 + $0x400] sm:$0xff]
      %v254 = vld [vmem:[%s116 + $0x408] sm:$0xff]
      %v255 = vld [vmem:[%s116 + $0x410] sm:$0xff]
      %v256 = vld [vmem:[%s116 + $0x418] sm:$0xff]
      %v257 = vld [vmem:[%s116 + $0x420] sm:$0xff]
      %v258 = vld [vmem:[%s116 + $0x428] sm:$0xff]
      %v259 = vld [vmem:[%s116 + $0x430] sm:$0xff]
      %v260 = vld [vmem:[%s116 + $0x438] sm:$0xff]
      %v261 = vld [vmem:[%s116 + $0x440] sm:$0xff]
      %v262 = vld [vmem:[%s116 + $0x448] sm:$0xff]
      %v263 = vld [vmem:[%s116 + $0x450] sm:$0xff]
      %v264 = vld [vmem:[%s116 + $0x458] sm:$0xff]
      %v265 = vld [vmem:[%s116 + $0x460] sm:$0xff]
      %v266 = vld [vmem:[%s116 + $0x468] sm:$0xff]
      %v267 = vld [vmem:[%s116 + $0x470] sm:$0xff]
      %v268 = vld [vmem:[%s116 + $0x478] sm:$0xff]
      %v269 = vld [vmem:[%s116 + $0x480] sm:$0xff]
      %v270 = vld [vmem:[%s116 + $0x488] sm:$0xff]
      %v271 = vld [vmem:[%s116 + $0x490] sm:$0xff]
      %v272 = vld [vmem:[%s116 + $0x498] sm:$0xff]
      %v273 = vld [vmem:[%s116 + $0x4a0] sm:$0xff]
      %v274 = vld [vmem:[%s116 + $0x4a8] sm:$0xff]
      %v275 = vld [vmem:[%s116 + $0x4b0] sm:$0xff]
      %v276 = vld [vmem:[%s116 + $0x4b8] sm:$0xff]
      %v277 = vld [vmem:[%s116 + $0x4c0] sm:$0xff]
      %v278 = vld [vmem:[%s116 + $0x4c8] sm:$0xff]
      %v279 = vld [vmem:[%s116 + $0x4d0] sm:$0xff]
      %v280 = vld [vmem:[%s116 + $0x4d8] sm:$0xff]
      %v281 = vld [vmem:[%s116 + $0x4e0] sm:$0xff]
      %v282 = vld [vmem:[%s116 + $0x4e8] sm:$0xff]
      %v283 = vld [vmem:[%s116 + $0x4f0] sm:$0xff]
      %v284 = vld [vmem:[%s116 + $0x4f8] sm:$0xff]
      %v285 = vld [vmem:[%s116 + $0x500] sm:$0xff]
      %v286 = vld [vmem:[%s116 + $0x508] sm:$0xff]
      %v287 = vld [vmem:[%s116 + $0x510] sm:$0xff]
      %v288 = vld [vmem:[%s116 + $0x518] sm:$0xff]
      %v289 = vld [vmem:[%s116 + $0x520] sm:$0xff]
      %v290 = vld [vmem:[%s116 + $0x528] sm:$0xff]
      %v291 = vld [vmem:[%s116 + $0x530] sm:$0xff]
      %v292 = vld [vmem:[%s116 + $0x538] sm:$0xff]
      %v293 = vld [vmem:[%s116 + $0x540] sm:$0xff]
      %v294 = vld [vmem:[%s116 + $0x548] sm:$0xff]
      %v295 = vld [vmem:[%s116 + $0x550] sm:$0xff]
      %v296 = vld [vmem:[%s116 + $0x558] sm:$0xff]
      %v297 = vld [vmem:[%s116 + $0x560] sm:$0xff]
      %v298 = vld [vmem:[%s116 + $0x568] sm:$0xff]
      %v299 = vld [vmem:[%s116 + $0x570] sm:$0xff]
      %v300 = vld [vmem:[%s116 + $0x578] sm:$0xff]
      %v301 = vld [vmem:[%s116 + $0x580] sm:$0xff]
      %v302 = vld [vmem:[%s116 + $0x588] sm:$0xff]
      %v303 = vld [vmem:[%s116 + $0x590] sm:$0xff]
      %v304 = vld [vmem:[%s116 + $0x598] sm:$0xff]
      %v305 = vld [vmem:[%s116 + $0x5a0] sm:$0xff]
      %v306 = vld [vmem:[%s116 + $0x5a8] sm:$0xff]
      %v307 = vld [vmem:[%s116 + $0x5b0] sm:$0xff]
      %v308 = vld [vmem:[%s116 + $0x5b8] sm:$0xff]
      %v309 = vld [vmem:[%s116 + $0x5c0] sm:$0xff]
      %v310 = vld [vmem:[%s116 + $0x5c8] sm:$0xff]
      %v311 = vld [vmem:[%s116 + $0x5d0] sm:$0xff]
      %v312 = vld [vmem:[%s116 + $0x5d8] sm:$0xff]
      %v313 = vld [vmem:[%s116 + $0x5e0] sm:$0xff]
      %v314 = vld [vmem:[%s116 + $0x5e8] sm:$0xff]
      %v315 = vld [vmem:[%s116 + $0x5f0] sm:$0xff]
      %v316 = vld [vmem:[%s116 + $0x5f8] sm:$0xff]
      %v317 = vld [vmem:[%s116 + $0x600] sm:$0xff]
      %v318 = vld [vmem:[%s116 + $0x608] sm:$0xff]
      %v319 = vld [vmem:[%s116 + $0x610] sm:$0xff]
      %v320 = vld [vmem:[%s116 + $0x618] sm:$0xff]
      %v321 = vld [vmem:[%s116 + $0x620] sm:$0xff]
      %v322 = vld [vmem:[%s116 + $0x628] sm:$0xff]
      %v323 = vld [vmem:[%s116 + $0x630] sm:$0xff]
      %v324 = vld [vmem:[%s116 + $0x638] sm:$0xff]
      %v325 = vld [vmem:[%s116 + $0x640] sm:$0xff]
      %v326 = vld [vmem:[%s116 + $0x648] sm:$0xff]
      %v327 = vld [vmem:[%s116 + $0x650] sm:$0xff]
      %v328 = vld [vmem:[%s116 + $0x658] sm:$0xff]
      %v329 = vld [vmem:[%s116 + $0x660] sm:$0xff]
      %v330 = vld [vmem:[%s116 + $0x668] sm:$0xff]
      %v331 = vld [vmem:[%s116 + $0x670] sm:$0xff]
      %v332 = vld [vmem:[%s116 + $0x678] sm:$0xff]
      %v333 = vld [vmem:[%s116 + $0x680] sm:$0xff]
      %v334 = vld [vmem:[%s116 + $0x688] sm:$0xff]
      %v335 = vld [vmem:[%s116 + $0x690] sm:$0xff]
      %v336 = vld [vmem:[%s116 + $0x698] sm:$0xff]
      %v337 = vld [vmem:[%s116 + $0x6a0] sm:$0xff]
      %v338 = vld [vmem:[%s116 + $0x6a8] sm:$0xff]
      %v339 = vld [vmem:[%s116 + $0x6b0] sm:$0xff]
      %v340 = vld [vmem:[%s116 + $0x6b8] sm:$0xff]
      %v341 = vld [vmem:[%s116 + $0x6c0] sm:$0xff]
      %v342 = vld [vmem:[%s116 + $0x6c8] sm:$0xff]
      %v343 = vld [vmem:[%s116 + $0x6d0] sm:$0xff]
      %v344 = vld [vmem:[%s116 + $0x6d8] sm:$0xff]
      %v345 = vld [vmem:[%s116 + $0x6e0] sm:$0xff]
      %v346 = vld [vmem:[%s116 + $0x6e8] sm:$0xff]
      %v347 = vld [vmem:[%s116 + $0x6f0] sm:$0xff]
      %v348 = vld [vmem:[%s116 + $0x6f8] sm:$0xff]
      %v349 = vld [vmem:[%s116 + $0x700] sm:$0xff]
      %v350 = vld [vmem:[%s116 + $0x708] sm:$0xff]
      %v351 = vld [vmem:[%s116 + $0x710] sm:$0xff]
      %v352 = vld [vmem:[%s116 + $0x718] sm:$0xff]
      %v353 = vld [vmem:[%s116 + $0x720] sm:$0xff]
      %v354 = vld [vmem:[%s116 + $0x728] sm:$0xff]
      %v355 = vld [vmem:[%s116 + $0x730] sm:$0xff]
      %v356 = vld [vmem:[%s116 + $0x738] sm:$0xff]
      %v357 = vld [vmem:[%s116 + $0x740] sm:$0xff]
      %v358 = vld [vmem:[%s116 + $0x748] sm:$0xff]
      %v359 = vld [vmem:[%s116 + $0x750] sm:$0xff]
      %v360 = vld [vmem:[%s116 + $0x758] sm:$0xff]
      %v361 = vld [vmem:[%s116 + $0x760] sm:$0xff]
      %v362 = vld [vmem:[%s116 + $0x768] sm:$0xff]
      %v363 = vld [vmem:[%s116 + $0x770] sm:$0xff]
      %v364 = vld [vmem:[%s116 + $0x778] sm:$0xff]
      %v365 = vld [vmem:[%s116 + $0x780] sm:$0xff]
      %v366 = vld [vmem:[%s116 + $0x788] sm:$0xff]
      %v367 = vld [vmem:[%s116 + $0x790] sm:$0xff]
      %v368 = vld [vmem:[%s116 + $0x798] sm:$0xff]
      %v369 = vld [vmem:[%s116 + $0x7a0] sm:$0xff]
      %v370 = vld [vmem:[%s116 + $0x7a8] sm:$0xff]
      %v371 = vld [vmem:[%s116 + $0x7b0] sm:$0xff]
      %v372 = vld [vmem:[%s116 + $0x7b8] sm:$0xff]
      %v373 = vld [vmem:[%s116 + $0x7c0] sm:$0xff]
      %v374 = vld [vmem:[%s116 + $0x7c8] sm:$0xff]
      %v375 = vld [vmem:[%s116 + $0x7d0] sm:$0xff]
      %v376 = vld [vmem:[%s116 + $0x7d8] sm:$0xff]
      %v377 = vld [vmem:[%s116 + $0x7e0] sm:$0xff]
      %v378 = vld [vmem:[%s116 + $0x7e8] sm:$0xff]
      %v379 = vld [vmem:[%s116 + $0x7f0] sm:$0xff]
      %v380 = vld [vmem:[%s116 + $0x7f8] sm:$0xff]
      %v381 = vld [vmem:[%s116 + $0x800] sm:$0xff]
      %v382 = vld [vmem:[%s116 + $0x808] sm:$0xff]
      %v383 = vld [vmem:[%s116 + $0x810] sm:$0xff]
      %v384 = vld [vmem:[%s116 + $0x818] sm:$0xff]
      %v385 = vld [vmem:[%s116 + $0x820] sm:$0xff]
      %v386 = vld [vmem:[%s116 + $0x828] sm:$0xff]
      %v387 = vld [vmem:[%s116 + $0x830] sm:$0xff]
      %v388 = vld [vmem:[%s116 + $0x838] sm:$0xff]
      %v389 = vld [vmem:[%s116 + $0x840] sm:$0xff]
      %v390 = vld [vmem:[%s116 + $0x848] sm:$0xff]
      %v391 = vld [vmem:[%s116 + $0x850] sm:$0xff]
      %v392 = vld [vmem:[%s116 + $0x858] sm:$0xff]
      %v393 = vld [vmem:[%s116 + $0x860] sm:$0xff]
      %v394 = vld [vmem:[%s116 + $0x868] sm:$0xff]
      %v395 = vld [vmem:[%s116 + $0x870] sm:$0xff]
      %v396 = vld [vmem:[%s116 + $0x878] sm:$0xff]
      %v397 = vld [vmem:[%s116 + $0x880] sm:$0xff]
      %v398 = vld [vmem:[%s116 + $0x888] sm:$0xff]
      %v399 = vld [vmem:[%s116 + $0x890] sm:$0xff]
      %v400 = vld [vmem:[%s116 + $0x898] sm:$0xff]
      %v401 = vld [vmem:[%s116 + $0x8a0] sm:$0xff]
      %v402 = vld [vmem:[%s116 + $0x8a8] sm:$0xff]
      %v403 = vld [vmem:[%s116 + $0x8b0] sm:$0xff]
      %v404 = vld [vmem:[%s116 + $0x8b8] sm:$0xff]
      %v405 = vld [vmem:[%s116 + $0x8c0] sm:$0xff]
      %v406 = vld [vmem:[%s116 + $0x8c8] sm:$0xff]
      %v407 = vld [vmem:[%s116 + $0x8d0] sm:$0xff]
      %v408 = vld [vmem:[%s116 + $0x8d8] sm:$0xff]
      %v409 = vld [vmem:[%s116 + $0x8e0] sm:$0xff]
      %v410 = vld [vmem:[%s116 + $0x8e8] sm:$0xff]
      %v411 = vld [vmem:[%s116 + $0x8f0] sm:$0xff]
      %v412 = vld [vmem:[%s116 + $0x8f8] sm:$0xff]
      %v413 = vld [vmem:[%s116 + $0x900] sm:$0xff]
      %v414 = vld [vmem:[%s116 + $0x908] sm:$0xff]
      %v415 = vld [vmem:[%s116 + $0x910] sm:$0xff]
      %v416 = vld [vmem:[%s116 + $0x918] sm:$0xff]
      %v417 = vld [vmem:[%s116 + $0x920] sm:$0xff]
      %v418 = vld [vmem:[%s116 + $0x928] sm:$0xff]
      %v419 = vld [vmem:[%s116 + $0x930] sm:$0xff]
      %v420 = vld [vmem:[%s116 + $0x938] sm:$0xff]
      %v421 = vld [vmem:[%s116 + $0x940] sm:$0xff]
      %v422 = vld [vmem:[%s116 + $0x948] sm:$0xff]
      %v423 = vld [vmem:[%s116 + $0x950] sm:$0xff]
      %v424 = vld [vmem:[%s116 + $0x958] sm:$0xff]
      %v425 = vld [vmem:[%s116 + $0x960] sm:$0xff]
      %v426 = vld [vmem:[%s116 + $0x968] sm:$0xff]
      %v427 = vld [vmem:[%s116 + $0x970] sm:$0xff]
      %v428 = vld [vmem:[%s116 + $0x978] sm:$0xff]
      %v429 = vld [vmem:[%s116 + $0x980] sm:$0xff]
      %v430 = vld [vmem:[%s116 + $0x988] sm:$0xff]
      %v431 = vld [vmem:[%s116 + $0x990] sm:$0xff]
      %v432 = vld [vmem:[%s116 + $0x998] sm:$0xff]
      %v433 = vld [vmem:[%s116 + $0x9a0] sm:$0xff]
      %v434 = vld [vmem:[%s116 + $0x9a8] sm:$0xff]
      %v435 = vld [vmem:[%s116 + $0x9b0] sm:$0xff]
      %v436 = vld [vmem:[%s116 + $0x9b8] sm:$0xff]
      %v437 = vld [vmem:[%s116 + $0x9c0] sm:$0xff]
      %v438 = vld [vmem:[%s116 + $0x9c8] sm:$0xff]
      %v439 = vld [vmem:[%s116 + $0x9d0] sm:$0xff]
      %v440 = vld [vmem:[%s116 + $0x9d8] sm:$0xff]
      %v441 = vld [vmem:[%s116 + $0x9e0] sm:$0xff]
      %v442 = vld [vmem:[%s116 + $0x9e8] sm:$0xff]
      %v443 = vld [vmem:[%s116 + $0x9f0] sm:$0xff]
      %v444 = vld [vmem:[%s116 + $0x9f8] sm:$0xff]
      %v445 = vld [vmem:[%s116 + $0xa00] sm:$0xff]
      %v446 = vld [vmem:[%s116 + $0xa08] sm:$0xff]
      %v447 = vld [vmem:[%s116 + $0xa10] sm:$0xff]
      %v448 = vld [vmem:[%s116 + $0xa18] sm:$0xff]
      %v449 = vld [vmem:[%s116 + $0xa20] sm:$0xff]
      %v450 = vld [vmem:[%s116 + $0xa28] sm:$0xff]
      %v451 = vld [vmem:[%s116 + $0xa30] sm:$0xff]
      %v452 = vld [vmem:[%s116 + $0xa38] sm:$0xff]
      %v453 = vld [vmem:[%s116 + $0xa40] sm:$0xff]
      %v454 = vld [vmem:[%s116 + $0xa48] sm:$0xff]
      %v455 = vld [vmem:[%s116 + $0xa50] sm:$0xff]
      %v456 = vld [vmem:[%s116 + $0xa58] sm:$0xff]
      %v457 = vld [vmem:[%s116 + $0xa60] sm:$0xff]
      %v458 = vld [vmem:[%s116 + $0xa68] sm:$0xff]
      %v459 = vld [vmem:[%s116 + $0xa70] sm:$0xff]
      %v460 = vld [vmem:[%s116 + $0xa78] sm:$0xff]
      %v461 = vld [vmem:[%s116 + $0xa80] sm:$0xff]
      %v462 = vld [vmem:[%s116 + $0xa88] sm:$0xff]
      %v463 = vld [vmem:[%s116 + $0xa90] sm:$0xff]
      %v464 = vld [vmem:[%s116 + $0xa98] sm:$0xff]
      %v465 = vld [vmem:[%s116 + $0xaa0] sm:$0xff]
      %v466 = vld [vmem:[%s116 + $0xaa8] sm:$0xff]
      %v467 = vld [vmem:[%s116 + $0xab0] sm:$0xff]
      %v468 = vld [vmem:[%s116 + $0xab8] sm:$0xff]
      %v469 = vld [vmem:[%s116 + $0xac0] sm:$0xff]
      %v470 = vld [vmem:[%s116 + $0xac8] sm:$0xff]
      %v471 = vld [vmem:[%s116 + $0xad0] sm:$0xff]
      %v472 = vld [vmem:[%s116 + $0xad8] sm:$0xff]
      %v473 = vld [vmem:[%s116 + $0xae0] sm:$0xff]
      %v474 = vld [vmem:[%s116 + $0xae8] sm:$0xff]
      %v475 = vld [vmem:[%s116 + $0xaf0] sm:$0xff]
      %v476 = vld [vmem:[%s116 + $0xaf8] sm:$0xff]
      %v477 = vld [vmem:[%s116 + $0xb00] sm:$0xff]
      %v478 = vld [vmem:[%s116 + $0xb08] sm:$0xff]
      %v479 = vld [vmem:[%s116 + $0xb10] sm:$0xff]
      %v480 = vld [vmem:[%s116 + $0xb18] sm:$0xff]
      %v481 = vld [vmem:[%s116 + $0xb20] sm:$0xff]
      %v482 = vld [vmem:[%s116 + $0xb28] sm:$0xff]
      %v483 = vld [vmem:[%s116 + $0xb30] sm:$0xff]
      %v484 = vld [vmem:[%s116 + $0xb38] sm:$0xff]
      %v485 = vld [vmem:[%s116 + $0xb40] sm:$0xff]
      %v486 = vld [vmem:[%s116 + $0xb48] sm:$0xff]
      %v487 = vld [vmem:[%s116 + $0xb50] sm:$0xff]
      %v488 = vld [vmem:[%s116 + $0xb58] sm:$0xff]
      %v489 = vld [vmem:[%s116 + $0xb60] sm:$0xff]
      %v490 = vld [vmem:[%s116 + $0xb68] sm:$0xff]
      %v491 = vld [vmem:[%s116 + $0xb70] sm:$0xff]
      %v492 = vld [vmem:[%s116 + $0xb78] sm:$0xff]
      %v493 = vld [vmem:[%s116 + $0xb80] sm:$0xff]
      %v494 = vld [vmem:[%s116 + $0xb88] sm:$0xff]
      %v495 = vld [vmem:[%s116 + $0xb90] sm:$0xff]
      %v496 = vld [vmem:[%s116 + $0xb98] sm:$0xff]
      %v497 = vld [vmem:[%s116 + $0xba0] sm:$0xff]
      %v498 = vld [vmem:[%s116 + $0xba8] sm:$0xff]
      %v499 = vld [vmem:[%s116 + $0xbb0] sm:$0xff]
      %v500 = vld [vmem:[%s116 + $0xbb8] sm:$0xff]
      %v501 = vld [vmem:[%s116 + $0xbc0] sm:$0xff]
      %v502 = vld [vmem:[%s116 + $0xbc8] sm:$0xff]
      %v503 = vld [vmem:[%s116 + $0xbd0] sm:$0xff]
      %v504 = vld [vmem:[%s116 + $0xbd8] sm:$0xff]
      %v505 = vld [vmem:[%s116 + $0xbe0] sm:$0xff]
      %v506 = vld [vmem:[%s116 + $0xbe8] sm:$0xff]
      %v507 = vld [vmem:[%s116 + $0xbf0] sm:$0xff]
      %v508 = vld [vmem:[%s116 + $0xbf8] sm:$0xff]
      %v509 = vld [vmem:[%s116 + $0xc00] sm:$0xff]
      %v510 = vld [vmem:[%s116 + $0xc08] sm:$0xff]
      %v511 = vld [vmem:[%s116 + $0xc10] sm:$0xff]
      %v512 = vld [vmem:[%s116 + $0xc18] sm:$0xff]
      %v513 = vld [vmem:[%s116 + $0xc20] sm:$0xff]
      %v514 = vld [vmem:[%s116 + $0xc28] sm:$0xff]
      %v515 = vld [vmem:[%s116 + $0xc30] sm:$0xff]
      %v516 = vld [vmem:[%s116 + $0xc38] sm:$0xff]
      %v517 = vld [vmem:[%s116 + $0xc40] sm:$0xff]
      %v518 = vld [vmem:[%s116 + $0xc48] sm:$0xff]
      %v519 = vld [vmem:[%s116 + $0xc50] sm:$0xff]
      %v520 = vld [vmem:[%s116 + $0xc58] sm:$0xff]
      %v521 = vld [vmem:[%s116 + $0xc60] sm:$0xff]
      %v522 = vld [vmem:[%s116 + $0xc68] sm:$0xff]
      %v523 = vld [vmem:[%s116 + $0xc70] sm:$0xff]
      %v524 = vld [vmem:[%s116 + $0xc78] sm:$0xff]
      %v525 = vld [vmem:[%s116 + $0xc80] sm:$0xff]
      %v526 = vld [vmem:[%s116 + $0xc88] sm:$0xff]
      %v527 = vld [vmem:[%s116 + $0xc90] sm:$0xff]
      %v528 = vld [vmem:[%s116 + $0xc98] sm:$0xff]
      %v529 = vld [vmem:[%s116 + $0xca0] sm:$0xff]
      %v530 = vld [vmem:[%s116 + $0xca8] sm:$0xff]
      %v531 = vld [vmem:[%s116 + $0xcb0] sm:$0xff]
      %v532 = vld [vmem:[%s116 + $0xcb8] sm:$0xff]
      %v533 = vld [vmem:[%s116 + $0xcc0] sm:$0xff]
      %v534 = vld [vmem:[%s116 + $0xcc8] sm:$0xff]
      %v535 = vld [vmem:[%s116 + $0xcd0] sm:$0xff]
      %v536 = vld [vmem:[%s116 + $0xcd8] sm:$0xff]
      %v537 = vld [vmem:[%s116 + $0xce0] sm:$0xff]
      %v538 = vld [vmem:[%s116 + $0xce8] sm:$0xff]
      %v539 = vld [vmem:[%s116 + $0xcf0] sm:$0xff]
      %v540 = vld [vmem:[%s116 + $0xcf8] sm:$0xff]
      %v541 = vld [vmem:[%s116 + $0xd00] sm:$0xff]
      %v542 = vld [vmem:[%s116 + $0xd08] sm:$0xff]
      %v543 = vld [vmem:[%s116 + $0xd10] sm:$0xff]
      %v544 = vld [vmem:[%s116 + $0xd18] sm:$0xff]
      %v545 = vld [vmem:[%s116 + $0xd20] sm:$0xff]
      %v546 = vld [vmem:[%s116 + $0xd28] sm:$0xff]
      %v547 = vld [vmem:[%s116 + $0xd30] sm:$0xff]
      %v548 = vld [vmem:[%s116 + $0xd38] sm:$0xff]
      %v549 = vld [vmem:[%s116 + $0xd40] sm:$0xff]
      %v550 = vld [vmem:[%s116 + $0xd48] sm:$0xff]
      %v551 = vld [vmem:[%s116 + $0xd50] sm:$0xff]
      %v552 = vld [vmem:[%s116 + $0xd58] sm:$0xff]
      %v553 = vld [vmem:[%s116 + $0xd60] sm:$0xff]
      %v554 = vld [vmem:[%s116 + $0xd68] sm:$0xff]
      %v555 = vld [vmem:[%s116 + $0xd70] sm:$0xff]
      %v556 = vld [vmem:[%s116 + $0xd78] sm:$0xff]
      %v557 = vld [vmem:[%s116 + $0xd80] sm:$0xff]
      %v558 = vld [vmem:[%s116 + $0xd88] sm:$0xff]
      %v559 = vld [vmem:[%s116 + $0xd90] sm:$0xff]
      %v560 = vld [vmem:[%s116 + $0xd98] sm:$0xff]
      %v561 = vld [vmem:[%s116 + $0xda0] sm:$0xff]
      %v562 = vld [vmem:[%s116 + $0xda8] sm:$0xff]
      %v563 = vld [vmem:[%s116 + $0xdb0] sm:$0xff]
      %v564 = vld [vmem:[%s116 + $0xdb8] sm:$0xff]
      %v565 = vld [vmem:[%s116 + $0xdc0] sm:$0xff]
      %v566 = vld [vmem:[%s116 + $0xdc8] sm:$0xff]
      %v567 = vld [vmem:[%s116 + $0xdd0] sm:$0xff]
      %v568 = vld [vmem:[%s116 + $0xdd8] sm:$0xff]
      %v569 = vld [vmem:[%s116 + $0xde0] sm:$0xff]
      %v570 = vld [vmem:[%s116 + $0xde8] sm:$0xff]
      %v571 = vld [vmem:[%s116 + $0xdf0] sm:$0xff]
      %v572 = vld [vmem:[%s116 + $0xdf8] sm:$0xff]
      %v573 = vld [vmem:[%s116 + $0xe00] sm:$0xff]
      %v574 = vld [vmem:[%s116 + $0xe08] sm:$0xff]
      %v575 = vld [vmem:[%s116 + $0xe10] sm:$0xff]
      %v576 = vld [vmem:[%s116 + $0xe18] sm:$0xff]
      %v577 = vld [vmem:[%s116 + $0xe20] sm:$0xff]
      %v578 = vld [vmem:[%s116 + $0xe28] sm:$0xff]
      %v579 = vld [vmem:[%s116 + $0xe30] sm:$0xff]
      %v580 = vld [vmem:[%s116 + $0xe38] sm:$0xff]
      %v581 = vld [vmem:[%s116 + $0xe40] sm:$0xff]
      %v582 = vld [vmem:[%s116 + $0xe48] sm:$0xff]
      %v583 = vld [vmem:[%s116 + $0xe50] sm:$0xff]
      %v584 = vld [vmem:[%s116 + $0xe58] sm:$0xff]
      %v585 = vld [vmem:[%s116 + $0xe60] sm:$0xff]
      %v586 = vld [vmem:[%s116 + $0xe68] sm:$0xff]
      %v587 = vld [vmem:[%s116 + $0xe70] sm:$0xff]
      %v588 = vld [vmem:[%s116 + $0xe78] sm:$0xff]
      %v589 = vld [vmem:[%s116 + $0xe80] sm:$0xff]
      %v590 = vld [vmem:[%s116 + $0xe88] sm:$0xff]
      %v591 = vld [vmem:[%s116 + $0xe90] sm:$0xff]
      %v592 = vld [vmem:[%s116 + $0xe98] sm:$0xff]
      %v593 = vld [vmem:[%s116 + $0xea0] sm:$0xff]
      %v594 = vld [vmem:[%s116 + $0xea8] sm:$0xff]
      %v595 = vld [vmem:[%s116 + $0xeb0] sm:$0xff]
      %v596 = vld [vmem:[%s116 + $0xeb8] sm:$0xff]
      %v597 = vld [vmem:[%s116 + $0xec0] sm:$0xff]
      %v598 = vld [vmem:[%s116 + $0xec8] sm:$0xff]
      %v599 = vld [vmem:[%s116 + $0xed0] sm:$0xff]
      %v600 = vld [vmem:[%s116 + $0xed8] sm:$0xff]
      %v601 = vld [vmem:[%s116 + $0xee0] sm:$0xff]
      %v602 = vld [vmem:[%s116 + $0xee8] sm:$0xff]
      %v603 = vld [vmem:[%s116 + $0xef0] sm:$0xff]
      %v604 = vld [vmem:[%s116 + $0xef8] sm:$0xff]
      %v605 = vld [vmem:[%s116 + $0xf00] sm:$0xff]
      %v606 = vld [vmem:[%s116 + $0xf08] sm:$0xff]
      %v607 = vld [vmem:[%s116 + $0xf10] sm:$0xff]
      %v608 = vld [vmem:[%s116 + $0xf18] sm:$0xff]
      %v609 = vld [vmem:[%s116 + $0xf20] sm:$0xff]
      %v610 = vld [vmem:[%s116 + $0xf28] sm:$0xff]
      %v611 = vld [vmem:[%s116 + $0xf30] sm:$0xff]
      %v612 = vld [vmem:[%s116 + $0xf38] sm:$0xff]
      %v613 = vld [vmem:[%s116 + $0xf40] sm:$0xff]
      %v614 = vld [vmem:[%s116 + $0xf48] sm:$0xff]
      %v615 = vld [vmem:[%s116 + $0xf50] sm:$0xff]
      %v616 = vld [vmem:[%s116 + $0xf58] sm:$0xff]
      %v617 = vld [vmem:[%s116 + $0xf60] sm:$0xff]
      %v618 = vld [vmem:[%s116 + $0xf68] sm:$0xff]
      %v619 = vld [vmem:[%s116 + $0xf70] sm:$0xff]
      %v620 = vld [vmem:[%s116 + $0xf78] sm:$0xff]
      %v621 = vld [vmem:[%s116 + $0xf80] sm:$0xff]
      %v622 = vld [vmem:[%s116 + $0xf88] sm:$0xff]
      %v623 = vld [vmem:[%s116 + $0xf90] sm:$0xff]
      %v624 = vld [vmem:[%s116 + $0xf98] sm:$0xff]
      %v625 = vld [vmem:[%s116 + $0xfa0] sm:$0xff]
      %v626 = vld [vmem:[%s116 + $0xfa8] sm:$0xff]
      %v627 = vld [vmem:[%s116 + $0xfb0] sm:$0xff]
      %v628 = vld [vmem:[%s116 + $0xfb8] sm:$0xff]
      %v629 = vld [vmem:[%s116 + $0xfc0] sm:$0xff]
      %v630 = vld [vmem:[%s116 + $0xfc8] sm:$0xff]
      %v631 = vld [vmem:[%s116 + $0xfd0] sm:$0xff]
      %v632 = vld [vmem:[%s116 + $0xfd8] sm:$0xff]
      %v633 = vld [vmem:[%s116 + $0xfe0] sm:$0xff]
      %v634 = vld [vmem:[%s116 + $0xfe8] sm:$0xff]
      %v635 = vld [vmem:[%s116 + $0xff0] sm:$0xff]
      %v636 = vld [vmem:[%s116 + $0xff8] sm:$0xff]
      %637 = vst [vmem:[%s123] sm:$0xff] %v125
      %638 = vst [vmem:[%s123 + $0x8] sm:$0xff] %v126
      %639 = vst [vmem:[%s123 + $0x10] sm:$0xff] %v127
      %640 = vst [vmem:[%s123 + $0x18] sm:$0xff] %v128
      %641 = vst [vmem:[%s123 + $0x20] sm:$0xff] %v129
      %642 = vst [vmem:[%s123 + $0x28] sm:$0xff] %v130
      %643 = vst [vmem:[%s123 + $0x30] sm:$0xff] %v131
      %644 = vst [vmem:[%s123 + $0x38] sm:$0xff] %v132
      %645 = vst [vmem:[%s123 + $0x40] sm:$0xff] %v133
      %646 = vst [vmem:[%s123 + $0x48] sm:$0xff] %v134
      %647 = vst [vmem:[%s123 + $0x50] sm:$0xff] %v135
      %648 = vst [vmem:[%s123 + $0x58] sm:$0xff] %v136
      %649 = vst [vmem:[%s123 + $0x60] sm:$0xff] %v137
      %650 = vst [vmem:[%s123 + $0x68] sm:$0xff] %v138
      %651 = vst [vmem:[%s123 + $0x70] sm:$0xff] %v139
      %652 = vst [vmem:[%s123 + $0x78] sm:$0xff] %v140
      %653 = vst [vmem:[%s123 + $0x80] sm:$0xff] %v141
      %654 = vst [vmem:[%s123 + $0x88] sm:$0xff] %v142
      %655 = vst [vmem:[%s123 + $0x90] sm:$0xff] %v143
      %656 = vst [vmem:[%s123 + $0x98] sm:$0xff] %v144
      %657 = vst [vmem:[%s123 + $0xa0] sm:$0xff] %v145
      %658 = vst [vmem:[%s123 + $0xa8] sm:$0xff] %v146
      %659 = vst [vmem:[%s123 + $0xb0] sm:$0xff] %v147
      %660 = vst [vmem:[%s123 + $0xb8] sm:$0xff] %v148
      %661 = vst [vmem:[%s123 + $0xc0] sm:$0xff] %v149
      %662 = vst [vmem:[%s123 + $0xc8] sm:$0xff] %v150
      %663 = vst [vmem:[%s123 + $0xd0] sm:$0xff] %v151
      %664 = vst [vmem:[%s123 + $0xd8] sm:$0xff] %v152
      %665 = vst [vmem:[%s123 + $0xe0] sm:$0xff] %v153
      %666 = vst [vmem:[%s123 + $0xe8] sm:$0xff] %v154
      %667 = vst [vmem:[%s123 + $0xf0] sm:$0xff] %v155
      %668 = vst [vmem:[%s123 + $0xf8] sm:$0xff] %v156
      %669 = vst [vmem:[%s123 + $0x100] sm:$0xff] %v157
      %670 = vst [vmem:[%s123 + $0x108] sm:$0xff] %v158
      %671 = vst [vmem:[%s123 + $0x110] sm:$0xff] %v159
      %672 = vst [vmem:[%s123 + $0x118] sm:$0xff] %v160
      %673 = vst [vmem:[%s123 + $0x120] sm:$0xff] %v161
      %674 = vst [vmem:[%s123 + $0x128] sm:$0xff] %v162
      %675 = vst [vmem:[%s123 + $0x130] sm:$0xff] %v163
      %676 = vst [vmem:[%s123 + $0x138] sm:$0xff] %v164
      %677 = vst [vmem:[%s123 + $0x140] sm:$0xff] %v165
      %678 = vst [vmem:[%s123 + $0x148] sm:$0xff] %v166
      %679 = vst [vmem:[%s123 + $0x150] sm:$0xff] %v167
      %680 = vst [vmem:[%s123 + $0x158] sm:$0xff] %v168
      %681 = vst [vmem:[%s123 + $0x160] sm:$0xff] %v169
      %682 = vst [vmem:[%s123 + $0x168] sm:$0xff] %v170
      %683 = vst [vmem:[%s123 + $0x170] sm:$0xff] %v171
      %684 = vst [vmem:[%s123 + $0x178] sm:$0xff] %v172
      %685 = vst [vmem:[%s123 + $0x180] sm:$0xff] %v173
      %686 = vst [vmem:[%s123 + $0x188] sm:$0xff] %v174
      %687 = vst [vmem:[%s123 + $0x190] sm:$0xff] %v175
      %688 = vst [vmem:[%s123 + $0x198] sm:$0xff] %v176
      %689 = vst [vmem:[%s123 + $0x1a0] sm:$0xff] %v177
      %690 = vst [vmem:[%s123 + $0x1a8] sm:$0xff] %v178
      %691 = vst [vmem:[%s123 + $0x1b0] sm:$0xff] %v179
      %692 = vst [vmem:[%s123 + $0x1b8] sm:$0xff] %v180
      %693 = vst [vmem:[%s123 + $0x1c0] sm:$0xff] %v181
      %694 = vst [vmem:[%s123 + $0x1c8] sm:$0xff] %v182
      %695 = vst [vmem:[%s123 + $0x1d0] sm:$0xff] %v183
      %696 = vst [vmem:[%s123 + $0x1d8] sm:$0xff] %v184
      %697 = vst [vmem:[%s123 + $0x1e0] sm:$0xff] %v185
      %698 = vst [vmem:[%s123 + $0x1e8] sm:$0xff] %v186
      %699 = vst [vmem:[%s123 + $0x1f0] sm:$0xff] %v187
      %700 = vst [vmem:[%s123 + $0x1f8] sm:$0xff] %v188
      %701 = vst [vmem:[%s123 + $0x200] sm:$0xff] %v189
      %702 = vst [vmem:[%s123 + $0x208] sm:$0xff] %v190
      %703 = vst [vmem:[%s123 + $0x210] sm:$0xff] %v191
      %704 = vst [vmem:[%s123 + $0x218] sm:$0xff] %v192
      %705 = vst [vmem:[%s123 + $0x220] sm:$0xff] %v193
      %706 = vst [vmem:[%s123 + $0x228] sm:$0xff] %v194
      %707 = vst [vmem:[%s123 + $0x230] sm:$0xff] %v195
      %708 = vst [vmem:[%s123 + $0x238] sm:$0xff] %v196
      %709 = vst [vmem:[%s123 + $0x240] sm:$0xff] %v197
      %710 = vst [vmem:[%s123 + $0x248] sm:$0xff] %v198
      %711 = vst [vmem:[%s123 + $0x250] sm:$0xff] %v199
      %712 = vst [vmem:[%s123 + $0x258] sm:$0xff] %v200
      %713 = vst [vmem:[%s123 + $0x260] sm:$0xff] %v201
      %714 = vst [vmem:[%s123 + $0x268] sm:$0xff] %v202
      %715 = vst [vmem:[%s123 + $0x270] sm:$0xff] %v203
      %716 = vst [vmem:[%s123 + $0x278] sm:$0xff] %v204
      %717 = vst [vmem:[%s123 + $0x280] sm:$0xff] %v205
      %718 = vst [vmem:[%s123 + $0x288] sm:$0xff] %v206
      %719 = vst [vmem:[%s123 + $0x290] sm:$0xff] %v207
      %720 = vst [vmem:[%s123 + $0x298] sm:$0xff] %v208
      %721 = vst [vmem:[%s123 + $0x2a0] sm:$0xff] %v209
      %722 = vst [vmem:[%s123 + $0x2a8] sm:$0xff] %v210
      %723 = vst [vmem:[%s123 + $0x2b0] sm:$0xff] %v211
      %724 = vst [vmem:[%s123 + $0x2b8] sm:$0xff] %v212
      %725 = vst [vmem:[%s123 + $0x2c0] sm:$0xff] %v213
      %726 = vst [vmem:[%s123 + $0x2c8] sm:$0xff] %v214
      %727 = vst [vmem:[%s123 + $0x2d0] sm:$0xff] %v215
      %728 = vst [vmem:[%s123 + $0x2d8] sm:$0xff] %v216
      %729 = vst [vmem:[%s123 + $0x2e0] sm:$0xff] %v217
      %730 = vst [vmem:[%s123 + $0x2e8] sm:$0xff] %v218
      %731 = vst [vmem:[%s123 + $0x2f0] sm:$0xff] %v219
      %732 = vst [vmem:[%s123 + $0x2f8] sm:$0xff] %v220
      %733 = vst [vmem:[%s123 + $0x300] sm:$0xff] %v221
      %734 = vst [vmem:[%s123 + $0x308] sm:$0xff] %v222
      %735 = vst [vmem:[%s123 + $0x310] sm:$0xff] %v223
      %736 = vst [vmem:[%s123 + $0x318] sm:$0xff] %v224
      %737 = vst [vmem:[%s123 + $0x320] sm:$0xff] %v225
      %738 = vst [vmem:[%s123 + $0x328] sm:$0xff] %v226
      %739 = vst [vmem:[%s123 + $0x330] sm:$0xff] %v227
      %740 = vst [vmem:[%s123 + $0x338] sm:$0xff] %v228
      %741 = vst [vmem:[%s123 + $0x340] sm:$0xff] %v229
      %742 = vst [vmem:[%s123 + $0x348] sm:$0xff] %v230
      %743 = vst [vmem:[%s123 + $0x350] sm:$0xff] %v231
      %744 = vst [vmem:[%s123 + $0x358] sm:$0xff] %v232
      %745 = vst [vmem:[%s123 + $0x360] sm:$0xff] %v233
      %746 = vst [vmem:[%s123 + $0x368] sm:$0xff] %v234
      %747 = vst [vmem:[%s123 + $0x370] sm:$0xff] %v235
      %748 = vst [vmem:[%s123 + $0x378] sm:$0xff] %v236
      %749 = vst [vmem:[%s123 + $0x380] sm:$0xff] %v237
      %750 = vst [vmem:[%s123 + $0x388] sm:$0xff] %v238
      %751 = vst [vmem:[%s123 + $0x390] sm:$0xff] %v239
      %752 = vst [vmem:[%s123 + $0x398] sm:$0xff] %v240
      %753 = vst [vmem:[%s123 + $0x3a0] sm:$0xff] %v241
      %754 = vst [vmem:[%s123 + $0x3a8] sm:$0xff] %v242
      %755 = vst [vmem:[%s123 + $0x3b0] sm:$0xff] %v243
      %756 = vst [vmem:[%s123 + $0x3b8] sm:$0xff] %v244
      %757 = vst [vmem:[%s123 + $0x3c0] sm:$0xff] %v245
      %758 = vst [vmem:[%s123 + $0x3c8] sm:$0xff] %v246
      %759 = vst [vmem:[%s123 + $0x3d0] sm:$0xff] %v247
      %760 = vst [vmem:[%s123 + $0x3d8] sm:$0xff] %v248
      %761 = vst [vmem:[%s123 + $0x3e0] sm:$0xff] %v249
      %762 = vst [vmem:[%s123 + $0x3e8] sm:$0xff] %v250
      %763 = vst [vmem:[%s123 + $0x3f0] sm:$0xff] %v251
      %764 = vst [vmem:[%s123 + $0x3f8] sm:$0xff] %v252
      %765 = vst [vmem:[%s123 + $0x400] sm:$0xff] %v253
      %766 = vst [vmem:[%s123 + $0x408] sm:$0xff] %v254
      %767 = vst [vmem:[%s123 + $0x410] sm:$0xff] %v255
      %768 = vst [vmem:[%s123 + $0x418] sm:$0xff] %v256
      %769 = vst [vmem:[%s123 + $0x420] sm:$0xff] %v257
      %770 = vst [vmem:[%s123 + $0x428] sm:$0xff] %v258
      %771 = vst [vmem:[%s123 + $0x430] sm:$0xff] %v259
      %772 = vst [vmem:[%s123 + $0x438] sm:$0xff] %v260
      %773 = vst [vmem:[%s123 + $0x440] sm:$0xff] %v261
      %774 = vst [vmem:[%s123 + $0x448] sm:$0xff] %v262
      %775 = vst [vmem:[%s123 + $0x450] sm:$0xff] %v263
      %776 = vst [vmem:[%s123 + $0x458] sm:$0xff] %v264
      %777 = vst [vmem:[%s123 + $0x460] sm:$0xff] %v265
      %778 = vst [vmem:[%s123 + $0x468] sm:$0xff] %v266
      %779 = vst [vmem:[%s123 + $0x470] sm:$0xff] %v267
      %780 = vst [vmem:[%s123 + $0x478] sm:$0xff] %v268
      %781 = vst [vmem:[%s123 + $0x480] sm:$0xff] %v269
      %782 = vst [vmem:[%s123 + $0x488] sm:$0xff] %v270
      %783 = vst [vmem:[%s123 + $0x490] sm:$0xff] %v271
      %784 = vst [vmem:[%s123 + $0x498] sm:$0xff] %v272
      %785 = vst [vmem:[%s123 + $0x4a0] sm:$0xff] %v273
      %786 = vst [vmem:[%s123 + $0x4a8] sm:$0xff] %v274
      %787 = vst [vmem:[%s123 + $0x4b0] sm:$0xff] %v275
      %788 = vst [vmem:[%s123 + $0x4b8] sm:$0xff] %v276
      %789 = vst [vmem:[%s123 + $0x4c0] sm:$0xff] %v277
      %790 = vst [vmem:[%s123 + $0x4c8] sm:$0xff] %v278
      %791 = vst [vmem:[%s123 + $0x4d0] sm:$0xff] %v279
      %792 = vst [vmem:[%s123 + $0x4d8] sm:$0xff] %v280
      %793 = vst [vmem:[%s123 + $0x4e0] sm:$0xff] %v281
      %794 = vst [vmem:[%s123 + $0x4e8] sm:$0xff] %v282
      %795 = vst [vmem:[%s123 + $0x4f0] sm:$0xff] %v283
      %796 = vst [vmem:[%s123 + $0x4f8] sm:$0xff] %v284
      %797 = vst [vmem:[%s123 + $0x500] sm:$0xff] %v285
      %798 = vst [vmem:[%s123 + $0x508] sm:$0xff] %v286
      %799 = vst [vmem:[%s123 + $0x510] sm:$0xff] %v287
      %800 = vst [vmem:[%s123 + $0x518] sm:$0xff] %v288
      %801 = vst [vmem:[%s123 + $0x520] sm:$0xff] %v289
      %802 = vst [vmem:[%s123 + $0x528] sm:$0xff] %v290
      %803 = vst [vmem:[%s123 + $0x530] sm:$0xff] %v291
      %804 = vst [vmem:[%s123 + $0x538] sm:$0xff] %v292
      %805 = vst [vmem:[%s123 + $0x540] sm:$0xff] %v293
      %806 = vst [vmem:[%s123 + $0x548] sm:$0xff] %v294
      %807 = vst [vmem:[%s123 + $0x550] sm:$0xff] %v295
      %808 = vst [vmem:[%s123 + $0x558] sm:$0xff] %v296
      %809 = vst [vmem:[%s123 + $0x560] sm:$0xff] %v297
      %810 = vst [vmem:[%s123 + $0x568] sm:$0xff] %v298
      %811 = vst [vmem:[%s123 + $0x570] sm:$0xff] %v299
      %812 = vst [vmem:[%s123 + $0x578] sm:$0xff] %v300
      %813 = vst [vmem:[%s123 + $0x580] sm:$0xff] %v301
      %814 = vst [vmem:[%s123 + $0x588] sm:$0xff] %v302
      %815 = vst [vmem:[%s123 + $0x590] sm:$0xff] %v303
      %816 = vst [vmem:[%s123 + $0x598] sm:$0xff] %v304
      %817 = vst [vmem:[%s123 + $0x5a0] sm:$0xff] %v305
      %818 = vst [vmem:[%s123 + $0x5a8] sm:$0xff] %v306
      %819 = vst [vmem:[%s123 + $0x5b0] sm:$0xff] %v307
      %820 = vst [vmem:[%s123 + $0x5b8] sm:$0xff] %v308
      %821 = vst [vmem:[%s123 + $0x5c0] sm:$0xff] %v309
      %822 = vst [vmem:[%s123 + $0x5c8] sm:$0xff] %v310
      %823 = vst [vmem:[%s123 + $0x5d0] sm:$0xff] %v311
      %824 = vst [vmem:[%s123 + $0x5d8] sm:$0xff] %v312
      %825 = vst [vmem:[%s123 + $0x5e0] sm:$0xff] %v313
      %826 = vst [vmem:[%s123 + $0x5e8] sm:$0xff] %v314
      %827 = vst [vmem:[%s123 + $0x5f0] sm:$0xff] %v315
      %828 = vst [vmem:[%s123 + $0x5f8] sm:$0xff] %v316
      %829 = vst [vmem:[%s123 + $0x600] sm:$0xff] %v317
      %830 = vst [vmem:[%s123 + $0x608] sm:$0xff] %v318
      %831 = vst [vmem:[%s123 + $0x610] sm:$0xff] %v319
      %832 = vst [vmem:[%s123 + $0x618] sm:$0xff] %v320
      %833 = vst [vmem:[%s123 + $0x620] sm:$0xff] %v321
      %834 = vst [vmem:[%s123 + $0x628] sm:$0xff] %v322
      %835 = vst [vmem:[%s123 + $0x630] sm:$0xff] %v323
      %836 = vst [vmem:[%s123 + $0x638] sm:$0xff] %v324
      %837 = vst [vmem:[%s123 + $0x640] sm:$0xff] %v325
      %838 = vst [vmem:[%s123 + $0x648] sm:$0xff] %v326
      %839 = vst [vmem:[%s123 + $0x650] sm:$0xff] %v327
      %840 = vst [vmem:[%s123 + $0x658] sm:$0xff] %v328
      %841 = vst [vmem:[%s123 + $0x660] sm:$0xff] %v329
      %842 = vst [vmem:[%s123 + $0x668] sm:$0xff] %v330
      %843 = vst [vmem:[%s123 + $0x670] sm:$0xff] %v331
      %844 = vst [vmem:[%s123 + $0x678] sm:$0xff] %v332
      %845 = vst [vmem:[%s123 + $0x680] sm:$0xff] %v333
      %846 = vst [vmem:[%s123 + $0x688] sm:$0xff] %v334
      %847 = vst [vmem:[%s123 + $0x690] sm:$0xff] %v335
      %848 = vst [vmem:[%s123 + $0x698] sm:$0xff] %v336
      %849 = vst [vmem:[%s123 + $0x6a0] sm:$0xff] %v337
      %850 = vst [vmem:[%s123 + $0x6a8] sm:$0xff] %v338
      %851 = vst [vmem:[%s123 + $0x6b0] sm:$0xff] %v339
      %852 = vst [vmem:[%s123 + $0x6b8] sm:$0xff] %v340
      %853 = vst [vmem:[%s123 + $0x6c0] sm:$0xff] %v341
      %854 = vst [vmem:[%s123 + $0x6c8] sm:$0xff] %v342
      %855 = vst [vmem:[%s123 + $0x6d0] sm:$0xff] %v343
      %856 = vst [vmem:[%s123 + $0x6d8] sm:$0xff] %v344
      %857 = vst [vmem:[%s123 + $0x6e0] sm:$0xff] %v345
      %858 = vst [vmem:[%s123 + $0x6e8] sm:$0xff] %v346
      %859 = vst [vmem:[%s123 + $0x6f0] sm:$0xff] %v347
      %860 = vst [vmem:[%s123 + $0x6f8] sm:$0xff] %v348
      %861 = vst [vmem:[%s123 + $0x700] sm:$0xff] %v349
      %862 = vst [vmem:[%s123 + $0x708] sm:$0xff] %v350
      %863 = vst [vmem:[%s123 + $0x710] sm:$0xff] %v351
      %864 = vst [vmem:[%s123 + $0x718] sm:$0xff] %v352
      %865 = vst [vmem:[%s123 + $0x720] sm:$0xff] %v353
      %866 = vst [vmem:[%s123 + $0x728] sm:$0xff] %v354
      %867 = vst [vmem:[%s123 + $0x730] sm:$0xff] %v355
      %868 = vst [vmem:[%s123 + $0x738] sm:$0xff] %v356
      %869 = vst [vmem:[%s123 + $0x740] sm:$0xff] %v357
      %870 = vst [vmem:[%s123 + $0x748] sm:$0xff] %v358
      %871 = vst [vmem:[%s123 + $0x750] sm:$0xff] %v359
      %872 = vst [vmem:[%s123 + $0x758] sm:$0xff] %v360
      %873 = vst [vmem:[%s123 + $0x760] sm:$0xff] %v361
      %874 = vst [vmem:[%s123 + $0x768] sm:$0xff] %v362
      %875 = vst [vmem:[%s123 + $0x770] sm:$0xff] %v363
      %876 = vst [vmem:[%s123 + $0x778] sm:$0xff] %v364
      %877 = vst [vmem:[%s123 + $0x780] sm:$0xff] %v365
      %878 = vst [vmem:[%s123 + $0x788] sm:$0xff] %v366
      %879 = vst [vmem:[%s123 + $0x790] sm:$0xff] %v367
      %880 = vst [vmem:[%s123 + $0x798] sm:$0xff] %v368
      %881 = vst [vmem:[%s123 + $0x7a0] sm:$0xff] %v369
      %882 = vst [vmem:[%s123 + $0x7a8] sm:$0xff] %v370
      %883 = vst [vmem:[%s123 + $0x7b0] sm:$0xff] %v371
      %884 = vst [vmem:[%s123 + $0x7b8] sm:$0xff] %v372
      %885 = vst [vmem:[%s123 + $0x7c0] sm:$0xff] %v373
      %886 = vst [vmem:[%s123 + $0x7c8] sm:$0xff] %v374
      %887 = vst [vmem:[%s123 + $0x7d0] sm:$0xff] %v375
      %888 = vst [vmem:[%s123 + $0x7d8] sm:$0xff] %v376
      %889 = vst [vmem:[%s123 + $0x7e0] sm:$0xff] %v377
      %890 = vst [vmem:[%s123 + $0x7e8] sm:$0xff] %v378
      %891 = vst [vmem:[%s123 + $0x7f0] sm:$0xff] %v379
      %892 = vst [vmem:[%s123 + $0x7f8] sm:$0xff] %v380
      %893 = vst [vmem:[%s123 + $0x800] sm:$0xff] %v381
      %894 = vst [vmem:[%s123 + $0x808] sm:$0xff] %v382
      %895 = vst [vmem:[%s123 + $0x810] sm:$0xff] %v383
      %896 = vst [vmem:[%s123 + $0x818] sm:$0xff] %v384
      %897 = vst [vmem:[%s123 + $0x820] sm:$0xff] %v385
      %898 = vst [vmem:[%s123 + $0x828] sm:$0xff] %v386
      %899 = vst [vmem:[%s123 + $0x830] sm:$0xff] %v387
      %900 = vst [vmem:[%s123 + $0x838] sm:$0xff] %v388
      %901 = vst [vmem:[%s123 + $0x840] sm:$0xff] %v389
      %902 = vst [vmem:[%s123 + $0x848] sm:$0xff] %v390
      %903 = vst [vmem:[%s123 + $0x850] sm:$0xff] %v391
      %904 = vst [vmem:[%s123 + $0x858] sm:$0xff] %v392
      %905 = vst [vmem:[%s123 + $0x860] sm:$0xff] %v393
      %906 = vst [vmem:[%s123 + $0x868] sm:$0xff] %v394
      %907 = vst [vmem:[%s123 + $0x870] sm:$0xff] %v395
      %908 = vst [vmem:[%s123 + $0x878] sm:$0xff] %v396
      %909 = vst [vmem:[%s123 + $0x880] sm:$0xff] %v397
      %910 = vst [vmem:[%s123 + $0x888] sm:$0xff] %v398
      %911 = vst [vmem:[%s123 + $0x890] sm:$0xff] %v399
      %912 = vst [vmem:[%s123 + $0x898] sm:$0xff] %v400
      %913 = vst [vmem:[%s123 + $0x8a0] sm:$0xff] %v401
      %914 = vst [vmem:[%s123 + $0x8a8] sm:$0xff] %v402
      %915 = vst [vmem:[%s123 + $0x8b0] sm:$0xff] %v403
      %916 = vst [vmem:[%s123 + $0x8b8] sm:$0xff] %v404
      %917 = vst [vmem:[%s123 + $0x8c0] sm:$0xff] %v405
      %918 = vst [vmem:[%s123 + $0x8c8] sm:$0xff] %v406
      %919 = vst [vmem:[%s123 + $0x8d0] sm:$0xff] %v407
      %920 = vst [vmem:[%s123 + $0x8d8] sm:$0xff] %v408
      %921 = vst [vmem:[%s123 + $0x8e0] sm:$0xff] %v409
      %922 = vst [vmem:[%s123 + $0x8e8] sm:$0xff] %v410
      %923 = vst [vmem:[%s123 + $0x8f0] sm:$0xff] %v411
      %924 = vst [vmem:[%s123 + $0x8f8] sm:$0xff] %v412
      %925 = vst [vmem:[%s123 + $0x900] sm:$0xff] %v413
      %926 = vst [vmem:[%s123 + $0x908] sm:$0xff] %v414
      %927 = vst [vmem:[%s123 + $0x910] sm:$0xff] %v415
      %928 = vst [vmem:[%s123 + $0x918] sm:$0xff] %v416
      %929 = vst [vmem:[%s123 + $0x920] sm:$0xff] %v417
      %930 = vst [vmem:[%s123 + $0x928] sm:$0xff] %v418
      %931 = vst [vmem:[%s123 + $0x930] sm:$0xff] %v419
      %932 = vst [vmem:[%s123 + $0x938] sm:$0xff] %v420
      %933 = vst [vmem:[%s123 + $0x940] sm:$0xff] %v421
      %934 = vst [vmem:[%s123 + $0x948] sm:$0xff] %v422
      %935 = vst [vmem:[%s123 + $0x950] sm:$0xff] %v423
      %936 = vst [vmem:[%s123 + $0x958] sm:$0xff] %v424
      %937 = vst [vmem:[%s123 + $0x960] sm:$0xff] %v425
      %938 = vst [vmem:[%s123 + $0x968] sm:$0xff] %v426
      %939 = vst [vmem:[%s123 + $0x970] sm:$0xff] %v427
      %940 = vst [vmem:[%s123 + $0x978] sm:$0xff] %v428
      %941 = vst [vmem:[%s123 + $0x980] sm:$0xff] %v429
      %942 = vst [vmem:[%s123 + $0x988] sm:$0xff] %v430
      %943 = vst [vmem:[%s123 + $0x990] sm:$0xff] %v431
      %944 = vst [vmem:[%s123 + $0x998] sm:$0xff] %v432
      %945 = vst [vmem:[%s123 + $0x9a0] sm:$0xff] %v433
      %946 = vst [vmem:[%s123 + $0x9a8] sm:$0xff] %v434
      %947 = vst [vmem:[%s123 + $0x9b0] sm:$0xff] %v435
      %948 = vst [vmem:[%s123 + $0x9b8] sm:$0xff] %v436
      %949 = vst [vmem:[%s123 + $0x9c0] sm:$0xff] %v437
      %950 = vst [vmem:[%s123 + $0x9c8] sm:$0xff] %v438
      %951 = vst [vmem:[%s123 + $0x9d0] sm:$0xff] %v439
      %952 = vst [vmem:[%s123 + $0x9d8] sm:$0xff] %v440
      %953 = vst [vmem:[%s123 + $0x9e0] sm:$0xff] %v441
      %954 = vst [vmem:[%s123 + $0x9e8] sm:$0xff] %v442
      %955 = vst [vmem:[%s123 + $0x9f0] sm:$0xff] %v443
      %956 = vst [vmem:[%s123 + $0x9f8] sm:$0xff] %v444
      %957 = vst [vmem:[%s123 + $0xa00] sm:$0xff] %v445
      %958 = vst [vmem:[%s123 + $0xa08] sm:$0xff] %v446
      %959 = vst [vmem:[%s123 + $0xa10] sm:$0xff] %v447
      %960 = vst [vmem:[%s123 + $0xa18] sm:$0xff] %v448
      %961 = vst [vmem:[%s123 + $0xa20] sm:$0xff] %v449
      %962 = vst [vmem:[%s123 + $0xa28] sm:$0xff] %v450
      %963 = vst [vmem:[%s123 + $0xa30] sm:$0xff] %v451
      %964 = vst [vmem:[%s123 + $0xa38] sm:$0xff] %v452
      %965 = vst [vmem:[%s123 + $0xa40] sm:$0xff] %v453
      %966 = vst [vmem:[%s123 + $0xa48] sm:$0xff] %v454
      %967 = vst [vmem:[%s123 + $0xa50] sm:$0xff] %v455
      %968 = vst [vmem:[%s123 + $0xa58] sm:$0xff] %v456
      %969 = vst [vmem:[%s123 + $0xa60] sm:$0xff] %v457
      %970 = vst [vmem:[%s123 + $0xa68] sm:$0xff] %v458
      %971 = vst [vmem:[%s123 + $0xa70] sm:$0xff] %v459
      %972 = vst [vmem:[%s123 + $0xa78] sm:$0xff] %v460
      %973 = vst [vmem:[%s123 + $0xa80] sm:$0xff] %v461
      %974 = vst [vmem:[%s123 + $0xa88] sm:$0xff] %v462
      %975 = vst [vmem:[%s123 + $0xa90] sm:$0xff] %v463
      %976 = vst [vmem:[%s123 + $0xa98] sm:$0xff] %v464
      %977 = vst [vmem:[%s123 + $0xaa0] sm:$0xff] %v465
      %978 = vst [vmem:[%s123 + $0xaa8] sm:$0xff] %v466
      %979 = vst [vmem:[%s123 + $0xab0] sm:$0xff] %v467
      %980 = vst [vmem:[%s123 + $0xab8] sm:$0xff] %v468
      %981 = vst [vmem:[%s123 + $0xac0] sm:$0xff] %v469
      %982 = vst [vmem:[%s123 + $0xac8] sm:$0xff] %v470
      %983 = vst [vmem:[%s123 + $0xad0] sm:$0xff] %v471
      %984 = vst [vmem:[%s123 + $0xad8] sm:$0xff] %v472
      %985 = vst [vmem:[%s123 + $0xae0] sm:$0xff] %v473
      %986 = vst [vmem:[%s123 + $0xae8] sm:$0xff] %v474
      %987 = vst [vmem:[%s123 + $0xaf0] sm:$0xff] %v475
      %988 = vst [vmem:[%s123 + $0xaf8] sm:$0xff] %v476
      %989 = vst [vmem:[%s123 + $0xb00] sm:$0xff] %v477
      %990 = vst [vmem:[%s123 + $0xb08] sm:$0xff] %v478
      %991 = vst [vmem:[%s123 + $0xb10] sm:$0xff] %v479
      %992 = vst [vmem:[%s123 + $0xb18] sm:$0xff] %v480
      %993 = vst [vmem:[%s123 + $0xb20] sm:$0xff] %v481
      %994 = vst [vmem:[%s123 + $0xb28] sm:$0xff] %v482
      %995 = vst [vmem:[%s123 + $0xb30] sm:$0xff] %v483
      %996 = vst [vmem:[%s123 + $0xb38] sm:$0xff] %v484
      %997 = vst [vmem:[%s123 + $0xb40] sm:$0xff] %v485
      %998 = vst [vmem:[%s123 + $0xb48] sm:$0xff] %v486
      %999 = vst [vmem:[%s123 + $0xb50] sm:$0xff] %v487
      %1000 = vst [vmem:[%s123 + $0xb58] sm:$0xff] %v488
      %1001 = vst [vmem:[%s123 + $0xb60] sm:$0xff] %v489
      %1002 = vst [vmem:[%s123 + $0xb68] sm:$0xff] %v490
      %1003 = vst [vmem:[%s123 + $0xb70] sm:$0xff] %v491
      %1004 = vst [vmem:[%s123 + $0xb78] sm:$0xff] %v492
      %1005 = vst [vmem:[%s123 + $0xb80] sm:$0xff] %v493
      %1006 = vst [vmem:[%s123 + $0xb88] sm:$0xff] %v494
      %1007 = vst [vmem:[%s123 + $0xb90] sm:$0xff] %v495
      %1008 = vst [vmem:[%s123 + $0xb98] sm:$0xff] %v496
      %1009 = vst [vmem:[%s123 + $0xba0] sm:$0xff] %v497
      %1010 = vst [vmem:[%s123 + $0xba8] sm:$0xff] %v498
      %1011 = vst [vmem:[%s123 + $0xbb0] sm:$0xff] %v499
      %1012 = vst [vmem:[%s123 + $0xbb8] sm:$0xff] %v500
      %1013 = vst [vmem:[%s123 + $0xbc0] sm:$0xff] %v501
      %1014 = vst [vmem:[%s123 + $0xbc8] sm:$0xff] %v502
      %1015 = vst [vmem:[%s123 + $0xbd0] sm:$0xff] %v503
      %1016 = vst [vmem:[%s123 + $0xbd8] sm:$0xff] %v504
      %1017 = vst [vmem:[%s123 + $0xbe0] sm:$0xff] %v505
      %1018 = vst [vmem:[%s123 + $0xbe8] sm:$0xff] %v506
      %1019 = vst [vmem:[%s123 + $0xbf0] sm:$0xff] %v507
      %1020 = vst [vmem:[%s123 + $0xbf8] sm:$0xff] %v508
      %1021 = vst [vmem:[%s123 + $0xc00] sm:$0xff] %v509
      %1022 = vst [vmem:[%s123 + $0xc08] sm:$0xff] %v510
      %1023 = vst [vmem:[%s123 + $0xc10] sm:$0xff] %v511
      %1024 = vst [vmem:[%s123 + $0xc18] sm:$0xff] %v512
      %1025 = vst [vmem:[%s123 + $0xc20] sm:$0xff] %v513
      %1026 = vst [vmem:[%s123 + $0xc28] sm:$0xff] %v514
      %1027 = vst [vmem:[%s123 + $0xc30] sm:$0xff] %v515
      %1028 = vst [vmem:[%s123 + $0xc38] sm:$0xff] %v516
      %1029 = vst [vmem:[%s123 + $0xc40] sm:$0xff] %v517
      %1030 = vst [vmem:[%s123 + $0xc48] sm:$0xff] %v518
      %1031 = vst [vmem:[%s123 + $0xc50] sm:$0xff] %v519
      %1032 = vst [vmem:[%s123 + $0xc58] sm:$0xff] %v520
      %1033 = vst [vmem:[%s123 + $0xc60] sm:$0xff] %v521
      %1034 = vst [vmem:[%s123 + $0xc68] sm:$0xff] %v522
      %1035 = vst [vmem:[%s123 + $0xc70] sm:$0xff] %v523
      %1036 = vst [vmem:[%s123 + $0xc78] sm:$0xff] %v524
      %1037 = vst [vmem:[%s123 + $0xc80] sm:$0xff] %v525
      %1038 = vst [vmem:[%s123 + $0xc88] sm:$0xff] %v526
      %1039 = vst [vmem:[%s123 + $0xc90] sm:$0xff] %v527
      %1040 = vst [vmem:[%s123 + $0xc98] sm:$0xff] %v528
      %1041 = vst [vmem:[%s123 + $0xca0] sm:$0xff] %v529
      %1042 = vst [vmem:[%s123 + $0xca8] sm:$0xff] %v530
      %1043 = vst [vmem:[%s123 + $0xcb0] sm:$0xff] %v531
      %1044 = vst [vmem:[%s123 + $0xcb8] sm:$0xff] %v532
      %1045 = vst [vmem:[%s123 + $0xcc0] sm:$0xff] %v533
      %1046 = vst [vmem:[%s123 + $0xcc8] sm:$0xff] %v534
      %1047 = vst [vmem:[%s123 + $0xcd0] sm:$0xff] %v535
      %1048 = vst [vmem:[%s123 + $0xcd8] sm:$0xff] %v536
      %1049 = vst [vmem:[%s123 + $0xce0] sm:$0xff] %v537
      %1050 = vst [vmem:[%s123 + $0xce8] sm:$0xff] %v538
      %1051 = vst [vmem:[%s123 + $0xcf0] sm:$0xff] %v539
      %1052 = vst [vmem:[%s123 + $0xcf8] sm:$0xff] %v540
      %1053 = vst [vmem:[%s123 + $0xd00] sm:$0xff] %v541
      %1054 = vst [vmem:[%s123 + $0xd08] sm:$0xff] %v542
      %1055 = vst [vmem:[%s123 + $0xd10] sm:$0xff] %v543
      %1056 = vst [vmem:[%s123 + $0xd18] sm:$0xff] %v544
      %1057 = vst [vmem:[%s123 + $0xd20] sm:$0xff] %v545
      %1058 = vst [vmem:[%s123 + $0xd28] sm:$0xff] %v546
      %1059 = vst [vmem:[%s123 + $0xd30] sm:$0xff] %v547
      %1060 = vst [vmem:[%s123 + $0xd38] sm:$0xff] %v548
      %1061 = vst [vmem:[%s123 + $0xd40] sm:$0xff] %v549
      %1062 = vst [vmem:[%s123 + $0xd48] sm:$0xff] %v550
      %1063 = vst [vmem:[%s123 + $0xd50] sm:$0xff] %v551
      %1064 = vst [vmem:[%s123 + $0xd58] sm:$0xff] %v552
      %1065 = vst [vmem:[%s123 + $0xd60] sm:$0xff] %v553
      %1066 = vst [vmem:[%s123 + $0xd68] sm:$0xff] %v554
      %1067 = vst [vmem:[%s123 + $0xd70] sm:$0xff] %v555
      %1068 = vst [vmem:[%s123 + $0xd78] sm:$0xff] %v556
      %1069 = vst [vmem:[%s123 + $0xd80] sm:$0xff] %v557
      %1070 = vst [vmem:[%s123 + $0xd88] sm:$0xff] %v558
      %1071 = vst [vmem:[%s123 + $0xd90] sm:$0xff] %v559
      %1072 = vst [vmem:[%s123 + $0xd98] sm:$0xff] %v560
      %1073 = vst [vmem:[%s123 + $0xda0] sm:$0xff] %v561
      %1074 = vst [vmem:[%s123 + $0xda8] sm:$0xff] %v562
      %1075 = vst [vmem:[%s123 + $0xdb0] sm:$0xff] %v563
      %1076 = vst [vmem:[%s123 + $0xdb8] sm:$0xff] %v564
      %1077 = vst [vmem:[%s123 + $0xdc0] sm:$0xff] %v565
      %1078 = vst [vmem:[%s123 + $0xdc8] sm:$0xff] %v566
      %1079 = vst [vmem:[%s123 + $0xdd0] sm:$0xff] %v567
      %1080 = vst [vmem:[%s123 + $0xdd8] sm:$0xff] %v568
      %1081 = vst [vmem:[%s123 + $0xde0] sm:$0xff] %v569
      %1082 = vst [vmem:[%s123 + $0xde8] sm:$0xff] %v570
      %1083 = vst [vmem:[%s123 + $0xdf0] sm:$0xff] %v571
      %1084 = vst [vmem:[%s123 + $0xdf8] sm:$0xff] %v572
      %1085 = vst [vmem:[%s123 + $0xe00] sm:$0xff] %v573
      %1086 = vst [vmem:[%s123 + $0xe08] sm:$0xff] %v574
      %1087 = vst [vmem:[%s123 + $0xe10] sm:$0xff] %v575
      %1088 = vst [vmem:[%s123 + $0xe18] sm:$0xff] %v576
      %1089 = vst [vmem:[%s123 + $0xe20] sm:$0xff] %v577
      %1090 = vst [vmem:[%s123 + $0xe28] sm:$0xff] %v578
      %1091 = vst [vmem:[%s123 + $0xe30] sm:$0xff] %v579
      %1092 = vst [vmem:[%s123 + $0xe38] sm:$0xff] %v580
      %1093 = vst [vmem:[%s123 + $0xe40] sm:$0xff] %v581
      %1094 = vst [vmem:[%s123 + $0xe48] sm:$0xff] %v582
      %1095 = vst [vmem:[%s123 + $0xe50] sm:$0xff] %v583
      %1096 = vst [vmem:[%s123 + $0xe58] sm:$0xff] %v584
      %1097 = vst [vmem:[%s123 + $0xe60] sm:$0xff] %v585
      %1098 = vst [vmem:[%s123 + $0xe68] sm:$0xff] %v586
      %1099 = vst [vmem:[%s123 + $0xe70] sm:$0xff] %v587
      %1100 = vst [vmem:[%s123 + $0xe78] sm:$0xff] %v588
      %1101 = vst [vmem:[%s123 + $0xe80] sm:$0xff] %v589
      %1102 = vst [vmem:[%s123 + $0xe88] sm:$0xff] %v590
      %1103 = vst [vmem:[%s123 + $0xe90] sm:$0xff] %v591
      %1104 = vst [vmem:[%s123 + $0xe98] sm:$0xff] %v592
      %1105 = vst [vmem:[%s123 + $0xea0] sm:$0xff] %v593
      %1106 = vst [vmem:[%s123 + $0xea8] sm:$0xff] %v594
      %1107 = vst [vmem:[%s123 + $0xeb0] sm:$0xff] %v595
      %1108 = vst [vmem:[%s123 + $0xeb8] sm:$0xff] %v596
      %1109 = vst [vmem:[%s123 + $0xec0] sm:$0xff] %v597
      %1110 = vst [vmem:[%s123 + $0xec8] sm:$0xff] %v598
      %1111 = vst [vmem:[%s123 + $0xed0] sm:$0xff] %v599
      %1112 = vst [vmem:[%s123 + $0xed8] sm:$0xff] %v600
      %1113 = vst [vmem:[%s123 + $0xee0] sm:$0xff] %v601
      %1114 = vst [vmem:[%s123 + $0xee8] sm:$0xff] %v602
      %1115 = vst [vmem:[%s123 + $0xef0] sm:$0xff] %v603
      %1116 = vst [vmem:[%s123 + $0xef8] sm:$0xff] %v604
      %1117 = vst [vmem:[%s123 + $0xf00] sm:$0xff] %v605
      %1118 = vst [vmem:[%s123 + $0xf08] sm:$0xff] %v606
      %1119 = vst [vmem:[%s123 + $0xf10] sm:$0xff] %v607
      %1120 = vst [vmem:[%s123 + $0xf18] sm:$0xff] %v608
      %1121 = vst [vmem:[%s123 + $0xf20] sm:$0xff] %v609
      %1122 = vst [vmem:[%s123 + $0xf28] sm:$0xff] %v610
      %1123 = vst [vmem:[%s123 + $0xf30] sm:$0xff] %v611
      %1124 = vst [vmem:[%s123 + $0xf38] sm:$0xff] %v612
      %1125 = vst [vmem:[%s123 + $0xf40] sm:$0xff] %v613
      %1126 = vst [vmem:[%s123 + $0xf48] sm:$0xff] %v614
      %1127 = vst [vmem:[%s123 + $0xf50] sm:$0xff] %v615
      %1128 = vst [vmem:[%s123 + $0xf58] sm:$0xff] %v616
      %1129 = vst [vmem:[%s123 + $0xf60] sm:$0xff] %v617
      %1130 = vst [vmem:[%s123 + $0xf68] sm:$0xff] %v618
      %1131 = vst [vmem:[%s123 + $0xf70] sm:$0xff] %v619
      %1132 = vst [vmem:[%s123 + $0xf78] sm:$0xff] %v620
      %1133 = vst [vmem:[%s123 + $0xf80] sm:$0xff] %v621
      %1134 = vst [vmem:[%s123 + $0xf88] sm:$0xff] %v622
      %1135 = vst [vmem:[%s123 + $0xf90] sm:$0xff] %v623
      %1136 = vst [vmem:[%s123 + $0xf98] sm:$0xff] %v624
      %1137 = vst [vmem:[%s123 + $0xfa0] sm:$0xff] %v625
      %1138 = vst [vmem:[%s123 + $0xfa8] sm:$0xff] %v626
      %1139 = vst [vmem:[%s123 + $0xfb0] sm:$0xff] %v627
      %1140 = vst [vmem:[%s123 + $0xfb8] sm:$0xff] %v628
      %1141 = vst [vmem:[%s123 + $0xfc0] sm:$0xff] %v629
      %1142 = vst [vmem:[%s123 + $0xfc8] sm:$0xff] %v630
      %1143 = vst [vmem:[%s123 + $0xfd0] sm:$0xff] %v631
      %1144 = vst [vmem:[%s123 + $0xfd8] sm:$0xff] %v632
      %1145 = vst [vmem:[%s123 + $0xfe0] sm:$0xff] %v633
      %1146 = vst [vmem:[%s123 + $0xfe8] sm:$0xff] %v634
      %1147 = vst [vmem:[%s123 + $0xff0] sm:$0xff] %v635
      %1148 = vst [vmem:[%s123 + $0xff8] sm:$0xff] %v636
      %s1149 = smul.u32 32, %s12
      %p1150 = scmp.lt.s32.totalorder %s1149, 127
      %s1151 = scalar_select %p1150, %s1149, 127
      %s1152 = smul.addr %s1151, 16
      %s1153 = smul.addr %s1152, 8
      %s1154 = scalar_lea.vmem %s1, %s1153
      // Predicated region
      $region25: #{_view_copy.1} parent=23 // pred_check
        %p1155 = pneg %p56
      $region26: #{_view_copy.1} parent=23 // pred_check_branch
        %1157 = sbr.rel (%p1155) target = $region28
      $region27: #{_view_copy.1} parent=23 // pred_region
        %s1158 = smul.u32 32, %s12
      $region28: #{_view_copy.1} parent=23 // pred_fallthru
        _
    $region24: #{_view_copy.1} parent=5 // pred_fallthru
      _
    %p1159 = scmp.le.s32.totalorder 2, %s7
    // Predicated region
    $region29: #{_view_copy.1} parent=5 // pred_check
      %p1160 = pneg %p1159
    $region30: #{_view_copy.1} parent=5 // pred_check_branch
      %1162 = sbr.rel (%p1160) target = $region32
    $region31: #{_view_copy.1} parent=5 // pred_region
      %s1163 = ssub.s32 %s7, 2
      // Predicated region
      $region33: #{_view_copy.1} parent=31 // pred_check
        %p1164 = pneg %p62
      $region34: #{_view_copy.1} parent=31 // pred_check_branch
        %1166 = sbr.rel (%p1164) target = $region36
      $region35: #{_view_copy.1} parent=31 // pred_region
        %s1167 = smul.u32 32, %s13
        %p1168 = scmp.lt.s32.totalorder %s1167, 127
        %s1169 = scalar_select %p1168, %s1167, 127
        %s1170 = smul.addr %s1169, 16
        %s1171 = smul.addr %s1170, 8
        %s1172 = scalar_lea.vmem %s1, %s1171
      $region36: #{_view_copy.1} parent=31 // pred_fallthru
        _
    $region32: #{_view_copy.1} parent=5 // pred_fallthru
      _
  $region6: #{_view_copy.1} parent=0 // loop_footer
    %s11 = sadd.s32 1, %s7
  $region7: #{_view_copy.1} parent=0 // loop_footer_branch
    %6 = sbr.rel target = $region3
  $region8: #{_view_copy.1} parent=0 // loop_exit
    _

</llo_original>
